<compile_context>
chip_gen: v6e
topology: v6e:2x2x1
jax: 0.10.0
libtpu: 0.0.40
codegen_flags: <defaults>
</compile_context>

<pallas_src>
import functools

import jax
import jax.numpy as jnp
from jax.experimental import pallas as pl
from jax.experimental.pallas import tpu as pltpu

_LANES = 128
_TARGET_BLOCK_BYTES = 8 * 1024 * 1024     # input bytes per grid step
_VMEM_LIMIT_BYTES = 48 * 1024 * 1024      # < v7x 64 MiB physical, << v5e/v6e 128 MiB
_MAX_PACKED_FEAT = 64                     # keeps W = (128*D, 128) f32 <= 4 MiB


def _round_up(x: int, m: int) -> int:
    return ((x + m - 1) // m) * m


def _sublane(dtype) -> int:
    # Native sublane tile: 8 for 4-byte, 16 for 2-byte, 32 for 1-byte dtypes.
    return max(8, 32 // jnp.dtype(dtype).itemsize)


def _multi_tensorcore() -> bool:
    # v4 / v5p (megacore) and v7x have 2 TensorCores per device; v5e/v6e have 1.
    try:
        kind = jax.devices()[0].device_kind.lower().replace(" ", "")
    except Exception:
        return False
    return any(tag in kind for tag in ("v4", "v5p", "v7", "7x"))


# ----------------------------------------------------------------------------
# Packed MXU path: any D <= _MAX_PACKED_FEAT.
# ----------------------------------------------------------------------------
def _packed_kernel(x_ref, w_ref, o_ref, *, precision):
    # x_ref: (tb, 128*D) -- 128 original rows per line, lane-dense.
    # w_ref: (128*D, 128) block-diagonal projection weight.
    # o_ref: (tb, 128)    -- one dot product per original row, lane-dense.
    x = x_ref[...]
    w = w_ref[...]
    if x.dtype != w.dtype:
        x = x.astype(w.dtype)
    o_ref[...] = jnp.dot(
        x, w, precision=precision, preferred_element_type=jnp.float32
    ).astype(o_ref.dtype)


def _projection_packed(x: jax.Array, d_norm: jax.Array, out_dtype) -> jax.Array:
    n, feat = x.shape

    # The free row-major reshape to 128-rows-per-line packing needs N % 128 == 0.
    if n % _LANES != 0:
        # TODO(synk): this whole-array pad (one extra HBM read+write) only
        # triggers for ragged N; a manual-DMA tail call would remove the copy.
        n_padded = _round_up(n, _LANES)
        x = jnp.pad(x, ((0, n_padded - n), (0, 0)))
    else:
        n_padded = n
    n_lines = n_padded // _LANES
    line_w = _LANES * feat
    xp = x.reshape(n_lines, line_w)                       # free, row-major

    # Compute dtype / MXU precision: exact f32 when the promoted dtype is >= f32,
    # single-pass bf16 otherwise.
    if jnp.dtype(out_dtype).itemsize >= 4:
        compute_dtype = jnp.float32
        precision = jax.lax.Precision.HIGHEST
    else:
        compute_dtype = jnp.dtype(out_dtype)
        precision = jax.lax.Precision.DEFAULT

    # Block-diagonal weight: W[j*feat + k, j] = d_norm[k].
    w = jnp.kron(jnp.eye(_LANES, dtype=jnp.float32), d_norm[:, None]).astype(compute_dtype)

    # Tile rows: ~8 MiB of input per grid step, rounded to the native sublane tile.
    sub = _sublane(x.dtype)
    line_bytes = line_w * jnp.dtype(x.dtype).itemsize
    budget_tb = max(sub, (_TARGET_BLOCK_BYTES // line_bytes) // sub * sub)
    if n_lines <= sub:
        tb = n_lines                                      # one block == full dim
    elif n_lines <= budget_tb:
        tb = (n_lines // sub) * sub                       # partial last block
    else:
        tb = budget_tb
    n_blocks = -(-n_lines // tb)

    # Only split a single-block medium problem when there are 2 TensorCores.
    if (n_blocks == 1 and n_lines > sub and _multi_tensorcore()
            and n_lines * line_bytes >= (4 << 20)):
        tb = _round_up(-(-n_lines // 2), sub)
        n_blocks = -(-n_lines // tb)

    kernel = functools.partial(_packed_kernel, precision=precision)
    out = pl.pallas_call(
        kernel,
        out_shape=jax.ShapeDtypeStruct((n_lines, _LANES), out_dtype),
        grid_spec=pltpu.PrefetchScalarGridSpec(
            num_scalar_prefetch=0,
            grid=(n_blocks,),
            in_specs=[
                pl.BlockSpec((tb, line_w), lambda i: (i, 0)),       # packed rows
                pl.BlockSpec((line_w, _LANES), lambda i: (0, 0)),   # weight (fetched once)
            ],
            out_specs=pl.BlockSpec((tb, _LANES), lambda i: (i, 0)),
        ),
        compiler_params=pltpu.CompilerParams(
            dimension_semantics=("parallel",),
            vmem_limit_bytes=_VMEM_LIMIT_BYTES,
        ),
    )(xp, w)

    out = out.reshape(n_padded, 1)                        # free, row-major
    return out[:n] if n_padded != n else out


# ----------------------------------------------------------------------------
# Fallback for very wide feature dims (W would not fit comfortably in VMEM).
# ----------------------------------------------------------------------------
def _rowwise_kernel(x_ref, d_ref, o_ref):
    x = x_ref[...].astype(jnp.float32)
    o_ref[...] = jnp.sum(x * d_ref[...], axis=1, keepdims=True).astype(o_ref.dtype)


def _projection_rowwise(x: jax.Array, d_norm: jax.Array, out_dtype) -> jax.Array:
    n, feat = x.shape
    sub = _sublane(x.dtype)
    row_bytes = feat * jnp.dtype(x.dtype).itemsize
    budget_tr = max(sub, (_TARGET_BLOCK_BYTES // row_bytes) // sub * sub)
    if n <= sub:
        tr = n
    elif n <= budget_tr:
        tr = (n // sub) * sub
    else:
        tr = budget_tr
    n_blocks = -(-n // tr)
    d2 = d_norm.astype(jnp.float32).reshape(1, feat)
    return pl.pallas_call(
        _rowwise_kernel,
        out_shape=jax.ShapeDtypeStruct((n, 1), out_dtype),
        grid_spec=pltpu.PrefetchScalarGridSpec(
            num_scalar_prefetch=0,
            grid=(n_blocks,),
            in_specs=[
                pl.BlockSpec((tr, feat), lambda i: (i, 0)),
                pl.BlockSpec((1, feat), lambda i: (0, 0)),
            ],
            out_specs=pl.BlockSpec((tr, 1), lambda i: (i, 0)),
        ),
        compiler_params=pltpu.CompilerParams(
            dimension_semantics=("parallel",),
            vmem_limit_bytes=_VMEM_LIMIT_BYTES,
        ),
    )(x, d2)


def projection_transform(x: jax.Array, direction: jax.Array) -> jax.Array:
    """Pallas equivalent of ProjectionTransform.forward: (x @ (dir/||dir||))[:, None]."""
    _, feat = x.shape
    assert direction.shape == (feat,)
    out_dtype = jnp.promote_types(x.dtype, direction.dtype)   # PyTorch-style promotion
    d = direction.astype(jnp.float32)
    d_norm = d / jnp.linalg.norm(d)                           # __init__ normalization (f32)
    if feat <= _MAX_PACKED_FEAT:
        return _projection_packed(x, d_norm, out_dtype)
    # TODO(synk): very wide feature dims use a simple row-tiled kernel; a
    # K-blocked MXU variant would be needed to keep those at roofline.
    return _projection_rowwise(x, d_norm, out_dtype)


if __name__ == "__main__":
    key = jax.random.PRNGKey(0)
    kx, kd = jax.random.split(key)

    # 6-D phase space, small particle batch (also exercises a non-power-of-two D).
    N, D = 1024, 6
    x = jax.random.normal(kx, (N, D), dtype=jnp.float32)
    direction = jax.random.normal(kd, (D,), dtype=jnp.float32)

    out = jax.block_until_ready(projection_transform(x, direction))

    d_norm = direction / jnp.linalg.norm(direction)
    ref = jnp.sum(x * d_norm, axis=1)[:, None]
    assert out.shape == (N, 1), out.shape
    assert jnp.allclose(out, ref, atol=1e-5, rtol=1e-5), "mismatch vs reference"

    # Ragged batch size (exercises the N % 128 != 0 pad path + partial blocks).
    N2 = 1000
    x2 = jax.random.normal(kx, (N2, D), dtype=jnp.float32)
    out2 = jax.block_until_ready(projection_transform(x2, direction))
    ref2 = jnp.sum(x2 * d_norm, axis=1)[:, None]
    assert out2.shape == (N2, 1), out2.shape
    assert jnp.allclose(out2, ref2, atol=1e-5, rtol=1e-5), "mismatch vs reference (ragged N)"

    print("KERNEL_OK")
</pallas_src>

<mosaic_0001>
module attributes {stable_mosaic.version = 11 : i64} {
  func.func @_packed_kernel(%arg0: i32, %arg1: memref<8x768xf32, #tpu.memory_space<vmem>>, %arg2: memref<768x128xf32, #tpu.memory_space<vmem>>, %arg3: memref<8x128xf32, #tpu.memory_space<vmem>>) attributes {dimension_semantics = [#tpu.dimension_semantics<parallel>], iteration_bounds = array<i64: 1>, scalar_prefetch = 0 : i64, scratch_operands = 0 : i64, tpu.core_type = #tpu.core_type<tc>, window_params = [{transform_indices = @transform_0, window_bounds = array<i64: 8, 768>}, {pipeline_mode = #tpu.pipeline_mode<synchronous>, transform_indices = @transform_1, window_bounds = array<i64: 768, 128>}, {transform_indices = @transform_2, window_bounds = array<i64: 8, 128>}]} {
    %c0 = arith.constant 0 : index
    %c0_0 = arith.constant 0 : index
    %0 = vector.load %arg1[%c0, %c0_0] : memref<8x768xf32, #tpu.memory_space<vmem>>, vector<8x768xf32>
    %c0_1 = arith.constant 0 : index
    %c0_2 = arith.constant 0 : index
    %1 = vector.load %arg2[%c0_1, %c0_2] : memref<768x128xf32, #tpu.memory_space<vmem>>, vector<768x128xf32>
    %cst = arith.constant dense<0.000000e+00> : vector<8x128xf32>
    %2 = tpu.matmul %0, %1, %cst {dimension_numbers = #tpu.dot_dimension_numbers<[1], [0], [0], [1], [0, 0, 1, 1], [], []>, precision = #tpu.contract_precision<fp32>} : vector<8x768xf32>, vector<768x128xf32>, vector<8x128xf32> -> vector<8x128xf32>
    %c0_3 = arith.constant 0 : index
    %c0_4 = arith.constant 0 : index
    %3 = vector.load %arg3[%c0_3, %c0_4] : memref<8x128xf32, #tpu.memory_space<vmem>>, vector<8x128xf32>
    tpu.vector_store %arg3[%c0_3, %c0_4], %2 {strides = array<i32>} : memref<8x128xf32, #tpu.memory_space<vmem>>, vector<8x128xf32>,
    return
  }
  func.func @transform_0(%arg0: i32) -> (i32, i32) {
    %c0_i32 = arith.constant 0 : i32
    %c0_i32_0 = arith.constant 0 : i32
    return %arg0, %c0_i32 : i32, i32
  }
  func.func @transform_1(%arg0: i32) -> (i32, i32) {
    %c0_i32 = arith.constant 0 : i32
    %c0_i32_0 = arith.constant 0 : i32
    %c0_i32_1 = arith.constant 0 : i32
    return %c0_i32, %c0_i32_0 : i32, i32
  }
  func.func @transform_2(%arg0: i32) -> (i32, i32) {
    %c0_i32 = arith.constant 0 : i32
    %c0_i32_0 = arith.constant 0 : i32
    return %arg0, %c0_i32 : i32, i32
  }
}

</mosaic_0001>

<llo_original>
// kernel: tpu_custom_call.1
$region0: #{tpu_custom_call.1}
  #allocation0 [shape = 'u32[]', space=smem, size = 0x4, offset = 0x4, fixed_abs, tag = 'smem constant byte address 0x4 - core index']
  #allocation1 [shape = 'u32[144,128]{1,0:T(1,128)}', space=vmem, size = 0x12000, scoped, tag = 'internal scratch']
  %s0 = inlined_call_operand.hbm [shape: f32[8,768], index: 0, kind: input, shape index: {}]
  %s1 = inlined_call_operand.hbm [shape: f32[768,128], index: 1, kind: input, shape index: {}]
  %s2 = inlined_call_operand.hbm [shape: f32[8,128], index: 2, kind: output, shape index: {}]
  %s3 = sld [smem:[#allocation0]]
  $region26: #{tpu_custom_call.1} parent=0
    _
  %s5 = ssub.s32 1, %s3
  %s6 = scalar_select 0, %s5, %s3
  $region1: #{tpu_custom_call.1} parent=0
    #allocation2 [shape = 'u8[24576]{0}', space=vmem, size = 0x6000, scoped, tag = 'input window, operand 0, single buffered']
    #allocation3 [shape = 's32[1]{0}', space=sflag, size = 0x4, scoped, tag = 'scoped memory for tpu_custom_call.1']
    #allocation4 [shape = 's32[1]{0}', space=sflag, size = 0x4, scoped, tag = 'scoped memory for tpu_custom_call.1']
    #allocation5 [shape = 'u8[393216]{0}', space=vmem, size = 0x60000, scoped, tag = 'input window, operand 1, single buffered']
    #allocation6 [shape = 's32[1]{0}', space=sflag, size = 0x4, scoped, tag = 'scoped memory for tpu_custom_call.1']
    #allocation7 [shape = 'u8[4096]{0}', space=vmem, size = 0x1000, scoped, tag = 'output window, operand 0, single buffered']
    %7 = vsyncpa [#allocation3], 0
    %8 = vsyncpa [#allocation6], 0
    %9 = vsyncpa [#allocation4], 0
    // Predicated region
    $region2: #{tpu_custom_call.1} parent=1 // pred_check
      _
    $region3: #{tpu_custom_call.1} parent=1 // pred_check_branch
      %11 = sbr.rel (0) target = $region5
    $region4: #{tpu_custom_call.1} parent=1 // pred_region
      %s13 = ssub.s32 768, 768
      %14 = vsyncadd [#allocation3], %s13
      %s16 = sshll.u32 [#allocation2], 4
      %s17 = int_to_ptr.vmem [resolvable:$true] %s16
      %19 = dma.hbm_to_vmem [thread:$0]  %s0, 768, %s17, [#allocation3]
    $region5: #{tpu_custom_call.1} parent=1 // pred_fallthru
      _
    // Predicated region
    $region6: #{tpu_custom_call.1} parent=1 // pred_check
      _
    $region7: #{tpu_custom_call.1} parent=1 // pred_check_branch
      %21 = sbr.rel (0) target = $region9
    $region8: #{tpu_custom_call.1} parent=1 // pred_region
      %s23 = ssub.s32 12288, 12288
      %24 = vsyncadd [#allocation6], %s23
      %s25 = sshll.u32 [#allocation5], 4
      %s26 = int_to_ptr.vmem [resolvable:$true] %s25
      %31 = dma.hbm_to_vmem [thread:$0]  %s1, 12288, %s26, [#allocation6], 128, 128, 8
    $region9: #{tpu_custom_call.1} parent=1 // pred_fallthru
      _
    // Predicated region
    $region10: #{tpu_custom_call.1} parent=1 // pred_check
      _
    $region11: #{tpu_custom_call.1} parent=1 // pred_check_branch
      %33 = sbr.rel (0) target = $region13
    $region12: #{tpu_custom_call.1} parent=1 // pred_region
      %34 = dma.done [#allocation3], 768
    $region13: #{tpu_custom_call.1} parent=1 // pred_fallthru
      _
    // Predicated region
    $region14: #{tpu_custom_call.1} parent=1 // pred_check
      _
    $region15: #{tpu_custom_call.1} parent=1 // pred_check_branch
      %36 = sbr.rel (0) target = $region17
    $region16: #{tpu_custom_call.1} parent=1 // pred_region
      %37 = dma.done [#allocation6], 12288
    $region17: #{tpu_custom_call.1} parent=1 // pred_fallthru
      _
    %v38 = vld [vmem:[#allocation2] sm:$0xff]
    %v39 = vld [vmem:[#allocation2 + $0x8] sm:$0xff]
    %v40 = vld [vmem:[#allocation2 + $0x10] sm:$0xff]
    %v41 = vld [vmem:[#allocation2 + $0x18] sm:$0xff]
    %v42 = vld [vmem:[#allocation2 + $0x20] sm:$0xff]
    %v43 = vld [vmem:[#allocation2 + $0x28] sm:$0xff]
    %v44 = vld [vmem:[#allocation5] sm:$0xff]
    %v45 = vld [vmem:[#allocation5 + $0x8] sm:$0xff]
    %v46 = vld [vmem:[#allocation5 + $0x10] sm:$0xff]
    %v47 = vld [vmem:[#allocation5 + $0x18] sm:$0xff]
    %v48 = vld [vmem:[#allocation5 + $0x20] sm:$0xff]
    %v49 = vld [vmem:[#allocation5 + $0x28] sm:$0xff]
    %v50 = vld [vmem:[#allocation5 + $0x30] sm:$0xff]
    %v51 = vld [vmem:[#allocation5 + $0x38] sm:$0xff]
    %v52 = vld [vmem:[#allocation5 + $0x40] sm:$0xff]
    %v53 = vld [vmem:[#allocation5 + $0x48] sm:$0xff]
    %v54 = vld [vmem:[#allocation5 + $0x50] sm:$0xff]
    %v55 = vld [vmem:[#allocation5 + $0x58] sm:$0xff]
    %v56 = vld [vmem:[#allocation5 + $0x60] sm:$0xff]
    %v57 = vld [vmem:[#allocation5 + $0x68] sm:$0xff]
    %v58 = vld [vmem:[#allocation5 + $0x70] sm:$0xff]
    %v59 = vld [vmem:[#allocation5 + $0x78] sm:$0xff]
    %v60 = vld [vmem:[#allocation5 + $0x80] sm:$0xff]
    %v61 = vld [vmem:[#allocation5 + $0x88] sm:$0xff]
    %v62 = vld [vmem:[#allocation5 + $0x90] sm:$0xff]
    %v63 = vld [vmem:[#allocation5 + $0x98] sm:$0xff]
    %v64 = vld [vmem:[#allocation5 + $0xa0] sm:$0xff]
    %v65 = vld [vmem:[#allocation5 + $0xa8] sm:$0xff]
    %v66 = vld [vmem:[#allocation5 + $0xb0] sm:$0xff]
    %v67 = vld [vmem:[#allocation5 + $0xb8] sm:$0xff]
    %v68 = vld [vmem:[#allocation5 + $0xc0] sm:$0xff]
    %v69 = vld [vmem:[#allocation5 + $0xc8] sm:$0xff]
    %v70 = vld [vmem:[#allocation5 + $0xd0] sm:$0xff]
    %v71 = vld [vmem:[#allocation5 + $0xd8] sm:$0xff]
    %v72 = vld [vmem:[#allocation5 + $0xe0] sm:$0xff]
    %v73 = vld [vmem:[#allocation5 + $0xe8] sm:$0xff]
    %v74 = vld [vmem:[#allocation5 + $0xf0] sm:$0xff]
    %v75 = vld [vmem:[#allocation5 + $0xf8] sm:$0xff]
    %v76 = vld [vmem:[#allocation5 + $0x100] sm:$0xff]
    %v77 = vld [vmem:[#allocation5 + $0x108] sm:$0xff]
    %v78 = vld [vmem:[#allocation5 + $0x110] sm:$0xff]
    %v79 = vld [vmem:[#allocation5 + $0x118] sm:$0xff]
    %v80 = vld [vmem:[#allocation5 + $0x120] sm:$0xff]
    %v81 = vld [vmem:[#allocation5 + $0x128] sm:$0xff]
    %v82 = vld [vmem:[#allocation5 + $0x130] sm:$0xff]
    %v83 = vld [vmem:[#allocation5 + $0x138] sm:$0xff]
    %v84 = vld [vmem:[#allocation5 + $0x140] sm:$0xff]
    %v85 = vld [vmem:[#allocation5 + $0x148] sm:$0xff]
    %v86 = vld [vmem:[#allocation5 + $0x150] sm:$0xff]
    %v87 = vld [vmem:[#allocation5 + $0x158] sm:$0xff]
    %v88 = vld [vmem:[#allocation5 + $0x160] sm:$0xff]
    %v89 = vld [vmem:[#allocation5 + $0x168] sm:$0xff]
    %v90 = vld [vmem:[#allocation5 + $0x170] sm:$0xff]
    %v91 = vld [vmem:[#allocation5 + $0x178] sm:$0xff]
    %v92 = vld [vmem:[#allocation5 + $0x180] sm:$0xff]
    %v93 = vld [vmem:[#allocation5 + $0x188] sm:$0xff]
    %v94 = vld [vmem:[#allocation5 + $0x190] sm:$0xff]
    %v95 = vld [vmem:[#allocation5 + $0x198] sm:$0xff]
    %v96 = vld [vmem:[#allocation5 + $0x1a0] sm:$0xff]
    %v97 = vld [vmem:[#allocation5 + $0x1a8] sm:$0xff]
    %v98 = vld [vmem:[#allocation5 + $0x1b0] sm:$0xff]
    %v99 = vld [vmem:[#allocation5 + $0x1b8] sm:$0xff]
    %v100 = vld [vmem:[#allocation5 + $0x1c0] sm:$0xff]
    %v101 = vld [vmem:[#allocation5 + $0x1c8] sm:$0xff]
    %v102 = vld [vmem:[#allocation5 + $0x1d0] sm:$0xff]
    %v103 = vld [vmem:[#allocation5 + $0x1d8] sm:$0xff]
    %v104 = vld [vmem:[#allocation5 + $0x1e0] sm:$0xff]
    %v105 = vld [vmem:[#allocation5 + $0x1e8] sm:$0xff]
    %v106 = vld [vmem:[#allocation5 + $0x1f0] sm:$0xff]
    %v107 = vld [vmem:[#allocation5 + $0x1f8] sm:$0xff]
    %v108 = vld [vmem:[#allocation5 + $0x200] sm:$0xff]
    %v109 = vld [vmem:[#allocation5 + $0x208] sm:$0xff]
    %v110 = vld [vmem:[#allocation5 + $0x210] sm:$0xff]
    %v111 = vld [vmem:[#allocation5 + $0x218] sm:$0xff]
    %v112 = vld [vmem:[#allocation5 + $0x220] sm:$0xff]
    %v113 = vld [vmem:[#allocation5 + $0x228] sm:$0xff]
    %v114 = vld [vmem:[#allocation5 + $0x230] sm:$0xff]
    %v115 = vld [vmem:[#allocation5 + $0x238] sm:$0xff]
    %v116 = vld [vmem:[#allocation5 + $0x240] sm:$0xff]
    %v117 = vld [vmem:[#allocation5 + $0x248] sm:$0xff]
    %v118 = vld [vmem:[#allocation5 + $0x250] sm:$0xff]
    %v119 = vld [vmem:[#allocation5 + $0x258] sm:$0xff]
    %v120 = vld [vmem:[#allocation5 + $0x260] sm:$0xff]
    %v121 = vld [vmem:[#allocation5 + $0x268] sm:$0xff]
    %v122 = vld [vmem:[#allocation5 + $0x270] sm:$0xff]
    %v123 = vld [vmem:[#allocation5 + $0x278] sm:$0xff]
    %v124 = vld [vmem:[#allocation5 + $0x280] sm:$0xff]
    %v125 = vld [vmem:[#allocation5 + $0x288] sm:$0xff]
    %v126 = vld [vmem:[#allocation5 + $0x290] sm:$0xff]
    %v127 = vld [vmem:[#allocation5 + $0x298] sm:$0xff]
    %v128 = vld [vmem:[#allocation5 + $0x2a0] sm:$0xff]
    %v129 = vld [vmem:[#allocation5 + $0x2a8] sm:$0xff]
    %v130 = vld [vmem:[#allocation5 + $0x2b0] sm:$0xff]
    %v131 = vld [vmem:[#allocation5 + $0x2b8] sm:$0xff]
    %v132 = vld [vmem:[#allocation5 + $0x2c0] sm:$0xff]
    %v133 = vld [vmem:[#allocation5 + $0x2c8] sm:$0xff]
    %v134 = vld [vmem:[#allocation5 + $0x2d0] sm:$0xff]
    %v135 = vld [vmem:[#allocation5 + $0x2d8] sm:$0xff]
    %v136 = vld [vmem:[#allocation5 + $0x2e0] sm:$0xff]
    %v137 = vld [vmem:[#allocation5 + $0x2e8] sm:$0xff]
    %v138 = vld [vmem:[#allocation5 + $0x2f0] sm:$0xff]
    %v139 = vld [vmem:[#allocation5 + $0x2f8] sm:$0xff]
    %140 = vmatprep.subr.mxu0 0.0
    %v141 = vand.u32 %v59, 4294901760
    %142 = vmatpush1.msra.mxu0 %v141
    %143 = vmatprep.subr.mxu0 0.0
    %v144 = vand.u32 %v58, 4294901760
    %145 = vmatpush1.msra.mxu0 %v144
    %146 = vmatprep.subr.mxu0 0.0
    %v147 = vand.u32 %v57, 4294901760
    %148 = vmatpush1.msra.mxu0 %v147
    %149 = vmatprep.subr.mxu0 0.0
    %v150 = vand.u32 %v56, 4294901760
    %151 = vmatpush1.msra.mxu0 %v150
    %152 = vmatprep.subr.mxu0 0.0
    %v153 = vand.u32 %v55, 4294901760
    %154 = vmatpush1.msra.mxu0 %v153
    %155 = vmatprep.subr.mxu0 0.0
    %v156 = vand.u32 %v54, 4294901760
    %157 = vmatpush1.msra.mxu0 %v156
    %158 = vmatprep.subr.mxu0 0.0
    %v159 = vand.u32 %v53, 4294901760
    %160 = vmatpush1.msra.mxu0 %v159
    %161 = vmatprep.subr.mxu0 0.0
    %v162 = vand.u32 %v52, 4294901760
    %163 = vmatpush1.msra.mxu0 %v162
    %164 = vmatprep.subr.mxu0 0.0
    %v165 = vand.u32 %v51, 4294901760
    %166 = vmatpush1.msra.mxu0 %v165
    %167 = vmatprep.subr.mxu0 0.0
    %v168 = vand.u32 %v50, 4294901760
    %169 = vmatpush1.msra.mxu0 %v168
    %170 = vmatprep.subr.mxu0 0.0
    %v171 = vand.u32 %v49, 4294901760
    %172 = vmatpush1.msra.mxu0 %v171
    %173 = vmatprep.subr.mxu0 0.0
    %v174 = vand.u32 %v48, 4294901760
    %175 = vmatpush1.msra.mxu0 %v174
    %176 = vmatprep.subr.mxu0 0.0
    %v177 = vand.u32 %v47, 4294901760
    %178 = vmatpush1.msra.mxu0 %v177
    %179 = vmatprep.subr.mxu0 0.0
    %v180 = vand.u32 %v46, 4294901760
    %181 = vmatpush1.msra.mxu0 %v180
    %182 = vmatprep.subr.mxu0 0.0
    %v183 = vand.u32 %v45, 4294901760
    %184 = vmatpush1.msra.mxu0 %v183
    %185 = vmatprep.subr.mxu0 0.0
    %v186 = vand.u32 %v44, 4294901760
    %187 = vmatpush1.msra.mxu0 %v186
    %188 = vmatprep.subr.mxu0 0.0
    %v189 = vand.u32 %v75, 4294901760
    %190 = vmatpush2.msra.mxu0 %v189
    %191 = vmatprep.subr.mxu0 0.0
    %v192 = vand.u32 %v74, 4294901760
    %193 = vmatpush2.msra.mxu0 %v192
    %194 = vmatprep.subr.mxu0 0.0
    %v195 = vand.u32 %v73, 4294901760
    %196 = vmatpush2.msra.mxu0 %v195
    %197 = vmatprep.subr.mxu0 0.0
    %v198 = vand.u32 %v72, 4294901760
    %199 = vmatpush2.msra.mxu0 %v198
    %200 = vmatprep.subr.mxu0 0.0
    %v201 = vand.u32 %v71, 4294901760
    %202 = vmatpush2.msra.mxu0 %v201
    %203 = vmatprep.subr.mxu0 0.0
    %v204 = vand.u32 %v70, 4294901760
    %205 = vmatpush2.msra.mxu0 %v204
    %206 = vmatprep.subr.mxu0 0.0
    %v207 = vand.u32 %v69, 4294901760
    %208 = vmatpush2.msra.mxu0 %v207
    %209 = vmatprep.subr.mxu0 0.0
    %v210 = vand.u32 %v68, 4294901760
    %211 = vmatpush2.msra.mxu0 %v210
    %212 = vmatprep.subr.mxu0 0.0
    %v213 = vand.u32 %v67, 4294901760
    %214 = vmatpush2.msra.mxu0 %v213
    %215 = vmatprep.subr.mxu0 0.0
    %v216 = vand.u32 %v66, 4294901760
    %217 = vmatpush2.msra.mxu0 %v216
    %218 = vmatprep.subr.mxu0 0.0
    %v219 = vand.u32 %v65, 4294901760
    %220 = vmatpush2.msra.mxu0 %v219
    %221 = vmatprep.subr.mxu0 0.0
    %v222 = vand.u32 %v64, 4294901760
    %223 = vmatpush2.msra.mxu0 %v222
    %224 = vmatprep.subr.mxu0 0.0
    %v225 = vand.u32 %v63, 4294901760
    %226 = vmatpush2.msra.mxu0 %v225
    %227 = vmatprep.subr.mxu0 0.0
    %v228 = vand.u32 %v62, 4294901760
    %229 = vmatpush2.msra.mxu0 %v228
    %230 = vmatprep.subr.mxu0 0.0
    %v231 = vand.u32 %v61, 4294901760
    %232 = vmatpush2.msra.mxu0 %v231
    %233 = vmatprep.subr.mxu0 0.0
    %v234 = vand.u32 %v60, 4294901760
    %235 = vmatpush2.msra.mxu0 %v234
    %v236 = vand.u32 %v39, 4294901760
    %v237 = vsub.f32 %v39, %v236
    %v238 = vand.u32 %v237, 4294901760
    %v239 = vsub.f32 %v237, %v238
    %v240 = vand.u32 %v239, 4294901760
    %241 = vmatprep.mubr.f32.mxu0 %v240
    %v242 = vand.u32 %v38, 4294901760
    %v243 = vsub.f32 %v38, %v242
    %v244 = vand.u32 %v243, 4294901760
    %v245 = vsub.f32 %v243, %v244
    %v246 = vand.u32 %v245, 4294901760
    %247 = vmatmul.mubr.f32.gmra.mxu0 %v246
    %v248 = vpop.f32.mrf.mxu0
    %v249 = vadd.f32 0.0, %v248
    %v250 = vpop.f32.mrf.mxu0
    %251 = vdwg.mxu0
    %252 = vmatprep.subr.mxu0 0.0
    %v253 = vand.u32 %v59, 4294901760
    %v254 = vsub.f32 %v59, %v253
    %v255 = vand.u32 %v254, 4294901760
    %v256 = vsub.f32 %v254, %v255
    %v257 = vand.u32 %v256, 4294901760
    %258 = vmatpush1.msra.mxu0 %v257
    %259 = vmatprep.subr.mxu0 0.0
    %v260 = vand.u32 %v58, 4294901760
    %v261 = vsub.f32 %v58, %v260
    %v262 = vand.u32 %v261, 4294901760
    %v263 = vsub.f32 %v261, %v262
    %v264 = vand.u32 %v263, 4294901760
    %265 = vmatpush1.msra.mxu0 %v264
    %266 = vmatprep.subr.mxu0 0.0
    %v267 = vand.u32 %v57, 4294901760
    %v268 = vsub.f32 %v57, %v267
    %v269 = vand.u32 %v268, 4294901760
    %v270 = vsub.f32 %v268, %v269
    %v271 = vand.u32 %v270, 4294901760
    %272 = vmatpush1.msra.mxu0 %v271
    %273 = vmatprep.subr.mxu0 0.0
    %v274 = vand.u32 %v56, 4294901760
    %v275 = vsub.f32 %v56, %v274
    %v276 = vand.u32 %v275, 4294901760
    %v277 = vsub.f32 %v275, %v276
    %v278 = vand.u32 %v277, 4294901760
    %279 = vmatpush1.msra.mxu0 %v278
    %280 = vmatprep.subr.mxu0 0.0
    %v281 = vand.u32 %v55, 4294901760
    %v282 = vsub.f32 %v55, %v281
    %v283 = vand.u32 %v282, 4294901760
    %v284 = vsub.f32 %v282, %v283
    %v285 = vand.u32 %v284, 4294901760
    %286 = vmatpush1.msra.mxu0 %v285
    %287 = vmatprep.subr.mxu0 0.0
    %v288 = vand.u32 %v54, 4294901760
    %v289 = vsub.f32 %v54, %v288
    %v290 = vand.u32 %v289, 4294901760
    %v291 = vsub.f32 %v289, %v290
    %v292 = vand.u32 %v291, 4294901760
    %293 = vmatpush1.msra.mxu0 %v292
    %294 = vmatprep.subr.mxu0 0.0
    %v295 = vand.u32 %v53, 4294901760
    %v296 = vsub.f32 %v53, %v295
    %v297 = vand.u32 %v296, 4294901760
    %v298 = vsub.f32 %v296, %v297
    %v299 = vand.u32 %v298, 4294901760
    %300 = vmatpush1.msra.mxu0 %v299
    %301 = vmatprep.subr.mxu0 0.0
    %v302 = vand.u32 %v52, 4294901760
    %v303 = vsub.f32 %v52, %v302
    %v304 = vand.u32 %v303, 4294901760
    %v305 = vsub.f32 %v303, %v304
    %v306 = vand.u32 %v305, 4294901760
    %307 = vmatpush1.msra.mxu0 %v306
    %308 = vmatprep.subr.mxu0 0.0
    %v309 = vand.u32 %v51, 4294901760
    %v310 = vsub.f32 %v51, %v309
    %v311 = vand.u32 %v310, 4294901760
    %v312 = vsub.f32 %v310, %v311
    %v313 = vand.u32 %v312, 4294901760
    %314 = vmatpush1.msra.mxu0 %v313
    %315 = vmatprep.subr.mxu0 0.0
    %v316 = vand.u32 %v50, 4294901760
    %v317 = vsub.f32 %v50, %v316
    %v318 = vand.u32 %v317, 4294901760
    %v319 = vsub.f32 %v317, %v318
    %v320 = vand.u32 %v319, 4294901760
    %321 = vmatpush1.msra.mxu0 %v320
    %322 = vmatprep.subr.mxu0 0.0
    %v323 = vand.u32 %v49, 4294901760
    %v324 = vsub.f32 %v49, %v323
    %v325 = vand.u32 %v324, 4294901760
    %v326 = vsub.f32 %v324, %v325
    %v327 = vand.u32 %v326, 4294901760
    %328 = vmatpush1.msra.mxu0 %v327
    %329 = vmatprep.subr.mxu0 0.0
    %v330 = vand.u32 %v48, 4294901760
    %v331 = vsub.f32 %v48, %v330
    %v332 = vand.u32 %v331, 4294901760
    %v333 = vsub.f32 %v331, %v332
    %v334 = vand.u32 %v333, 4294901760
    %335 = vmatpush1.msra.mxu0 %v334
    %336 = vmatprep.subr.mxu0 0.0
    %v337 = vand.u32 %v47, 4294901760
    %v338 = vsub.f32 %v47, %v337
    %v339 = vand.u32 %v338, 4294901760
    %v340 = vsub.f32 %v338, %v339
    %v341 = vand.u32 %v340, 4294901760
    %342 = vmatpush1.msra.mxu0 %v341
    %343 = vmatprep.subr.mxu0 0.0
    %v344 = vand.u32 %v46, 4294901760
    %v345 = vsub.f32 %v46, %v344
    %v346 = vand.u32 %v345, 4294901760
    %v347 = vsub.f32 %v345, %v346
    %v348 = vand.u32 %v347, 4294901760
    %349 = vmatpush1.msra.mxu0 %v348
    %350 = vmatprep.subr.mxu0 0.0
    %v351 = vand.u32 %v45, 4294901760
    %v352 = vsub.f32 %v45, %v351
    %v353 = vand.u32 %v352, 4294901760
    %v354 = vsub.f32 %v352, %v353
    %v355 = vand.u32 %v354, 4294901760
    %356 = vmatpush1.msra.mxu0 %v355
    %357 = vmatprep.subr.mxu0 0.0
    %v358 = vand.u32 %v44, 4294901760
    %v359 = vsub.f32 %v44, %v358
    %v360 = vand.u32 %v359, 4294901760
    %v361 = vsub.f32 %v359, %v360
    %v362 = vand.u32 %v361, 4294901760
    %363 = vmatpush1.msra.mxu0 %v362
    %364 = vmatprep.subr.mxu0 0.0
    %v365 = vand.u32 %v75, 4294901760
    %v366 = vsub.f32 %v75, %v365
    %v367 = vand.u32 %v366, 4294901760
    %v368 = vsub.f32 %v366, %v367
    %v369 = vand.u32 %v368, 4294901760
    %370 = vmatpush2.msra.mxu0 %v369
    %371 = vmatprep.subr.mxu0 0.0
    %v372 = vand.u32 %v74, 4294901760
    %v373 = vsub.f32 %v74, %v372
    %v374 = vand.u32 %v373, 4294901760
    %v375 = vsub.f32 %v373, %v374
    %v376 = vand.u32 %v375, 4294901760
    %377 = vmatpush2.msra.mxu0 %v376
    %378 = vmatprep.subr.mxu0 0.0
    %v379 = vand.u32 %v73, 4294901760
    %v380 = vsub.f32 %v73, %v379
    %v381 = vand.u32 %v380, 4294901760
    %v382 = vsub.f32 %v380, %v381
    %v383 = vand.u32 %v382, 4294901760
    %384 = vmatpush2.msra.mxu0 %v383
    %385 = vmatprep.subr.mxu0 0.0
    %v386 = vand.u32 %v72, 4294901760
    %v387 = vsub.f32 %v72, %v386
    %v388 = vand.u32 %v387, 4294901760
    %v389 = vsub.f32 %v387, %v388
    %v390 = vand.u32 %v389, 4294901760
    %391 = vmatpush2.msra.mxu0 %v390
    %392 = vmatprep.subr.mxu0 0.0
    %v393 = vand.u32 %v71, 4294901760
    %v394 = vsub.f32 %v71, %v393
    %v395 = vand.u32 %v394, 4294901760
    %v396 = vsub.f32 %v394, %v395
    %v397 = vand.u32 %v396, 4294901760
    %398 = vmatpush2.msra.mxu0 %v397
    %399 = vmatprep.subr.mxu0 0.0
    %v400 = vand.u32 %v70, 4294901760
    %v401 = vsub.f32 %v70, %v400
    %v402 = vand.u32 %v401, 4294901760
    %v403 = vsub.f32 %v401, %v402
    %v404 = vand.u32 %v403, 4294901760
    %405 = vmatpush2.msra.mxu0 %v404
    %406 = vmatprep.subr.mxu0 0.0
    %v407 = vand.u32 %v69, 4294901760
    %v408 = vsub.f32 %v69, %v407
    %v409 = vand.u32 %v408, 4294901760
    %v410 = vsub.f32 %v408, %v409
    %v411 = vand.u32 %v410, 4294901760
    %412 = vmatpush2.msra.mxu0 %v411
    %413 = vmatprep.subr.mxu0 0.0
    %v414 = vand.u32 %v68, 4294901760
    %v415 = vsub.f32 %v68, %v414
    %v416 = vand.u32 %v415, 4294901760
    %v417 = vsub.f32 %v415, %v416
    %v418 = vand.u32 %v417, 4294901760
    %419 = vmatpush2.msra.mxu0 %v418
    %420 = vmatprep.subr.mxu0 0.0
    %v421 = vand.u32 %v67, 4294901760
    %v422 = vsub.f32 %v67, %v421
    %v423 = vand.u32 %v422, 4294901760
    %v424 = vsub.f32 %v422, %v423
    %v425 = vand.u32 %v424, 4294901760
    %426 = vmatpush2.msra.mxu0 %v425
    %427 = vmatprep.subr.mxu0 0.0
    %v428 = vand.u32 %v66, 4294901760
    %v429 = vsub.f32 %v66, %v428
    %v430 = vand.u32 %v429, 4294901760
    %v431 = vsub.f32 %v429, %v430
    %v432 = vand.u32 %v431, 4294901760
    %433 = vmatpush2.msra.mxu0 %v432
    %434 = vmatprep.subr.mxu0 0.0
    %v435 = vand.u32 %v65, 4294901760
    %v436 = vsub.f32 %v65, %v435
    %v437 = vand.u32 %v436, 4294901760
    %v438 = vsub.f32 %v436, %v437
    %v439 = vand.u32 %v438, 4294901760
    %440 = vmatpush2.msra.mxu0 %v439
    %441 = vmatprep.subr.mxu0 0.0
    %v442 = vand.u32 %v64, 4294901760
    %v443 = vsub.f32 %v64, %v442
    %v444 = vand.u32 %v443, 4294901760
    %v445 = vsub.f32 %v443, %v444
    %v446 = vand.u32 %v445, 4294901760
    %447 = vmatpush2.msra.mxu0 %v446
    %448 = vmatprep.subr.mxu0 0.0
    %v449 = vand.u32 %v63, 4294901760
    %v450 = vsub.f32 %v63, %v449
    %v451 = vand.u32 %v450, 4294901760
    %v452 = vsub.f32 %v450, %v451
    %v453 = vand.u32 %v452, 4294901760
    %454 = vmatpush2.msra.mxu0 %v453
    %455 = vmatprep.subr.mxu0 0.0
    %v456 = vand.u32 %v62, 4294901760
    %v457 = vsub.f32 %v62, %v456
    %v458 = vand.u32 %v457, 4294901760
    %v459 = vsub.f32 %v457, %v458
    %v460 = vand.u32 %v459, 4294901760
    %461 = vmatpush2.msra.mxu0 %v460
    %462 = vmatprep.subr.mxu0 0.0
    %v463 = vand.u32 %v61, 4294901760
    %v464 = vsub.f32 %v61, %v463
    %v465 = vand.u32 %v464, 4294901760
    %v466 = vsub.f32 %v464, %v465
    %v467 = vand.u32 %v466, 4294901760
    %468 = vmatpush2.msra.mxu0 %v467
    %469 = vmatprep.subr.mxu0 0.0
    %v470 = vand.u32 %v60, 4294901760
    %v471 = vsub.f32 %v60, %v470
    %v472 = vand.u32 %v471, 4294901760
    %v473 = vsub.f32 %v471, %v472
    %v474 = vand.u32 %v473, 4294901760
    %475 = vmatpush2.msra.mxu0 %v474
    %v476 = vand.u32 %v39, 4294901760
    %477 = vmatprep.mubr.f32.mxu0 %v476
    %v478 = vand.u32 %v38, 4294901760
    %479 = vmatmul.mubr.f32.gmra.mxu0 %v478
    %v480 = vpop.f32.mrf.mxu0
    %v481 = vadd.f32 %v249, %v480
    %v482 = vpop.f32.mrf.mxu0
    %483 = vdwg.mxu0
    %484 = vmatprep.subr.mxu0 0.0
    %v485 = vand.u32 %v59, 4294901760
    %v486 = vsub.f32 %v59, %v485
    %487 = vmatpush1.msra.mxu0 %v486
    %488 = vmatprep.subr.mxu0 0.0
    %v489 = vand.u32 %v58, 4294901760
    %v490 = vsub.f32 %v58, %v489
    %491 = vmatpush1.msra.mxu0 %v490
    %492 = vmatprep.subr.mxu0 0.0
    %v493 = vand.u32 %v57, 4294901760
    %v494 = vsub.f32 %v57, %v493
    %495 = vmatpush1.msra.mxu0 %v494
    %496 = vmatprep.subr.mxu0 0.0
    %v497 = vand.u32 %v56, 4294901760
    %v498 = vsub.f32 %v56, %v497
    %499 = vmatpush1.msra.mxu0 %v498
    %500 = vmatprep.subr.mxu0 0.0
    %v501 = vand.u32 %v55, 4294901760
    %v502 = vsub.f32 %v55, %v501
    %503 = vmatpush1.msra.mxu0 %v502
    %504 = vmatprep.subr.mxu0 0.0
    %v505 = vand.u32 %v54, 4294901760
    %v506 = vsub.f32 %v54, %v505
    %507 = vmatpush1.msra.mxu0 %v506
    %508 = vmatprep.subr.mxu0 0.0
    %v509 = vand.u32 %v53, 4294901760
    %v510 = vsub.f32 %v53, %v509
    %511 = vmatpush1.msra.mxu0 %v510
    %512 = vmatprep.subr.mxu0 0.0
    %v513 = vand.u32 %v52, 4294901760
    %v514 = vsub.f32 %v52, %v513
    %515 = vmatpush1.msra.mxu0 %v514
    %516 = vmatprep.subr.mxu0 0.0
    %v517 = vand.u32 %v51, 4294901760
    %v518 = vsub.f32 %v51, %v517
    %519 = vmatpush1.msra.mxu0 %v518
    %520 = vmatprep.subr.mxu0 0.0
    %v521 = vand.u32 %v50, 4294901760
    %v522 = vsub.f32 %v50, %v521
    %523 = vmatpush1.msra.mxu0 %v522
    %524 = vmatprep.subr.mxu0 0.0
    %v525 = vand.u32 %v49, 4294901760
    %v526 = vsub.f32 %v49, %v525
    %527 = vmatpush1.msra.mxu0 %v526
    %528 = vmatprep.subr.mxu0 0.0
    %v529 = vand.u32 %v48, 4294901760
    %v530 = vsub.f32 %v48, %v529
    %531 = vmatpush1.msra.mxu0 %v530
    %532 = vmatprep.subr.mxu0 0.0
    %v533 = vand.u32 %v47, 4294901760
    %v534 = vsub.f32 %v47, %v533
    %535 = vmatpush1.msra.mxu0 %v534
    %536 = vmatprep.subr.mxu0 0.0
    %v537 = vand.u32 %v46, 4294901760
    %v538 = vsub.f32 %v46, %v537
    %539 = vmatpush1.msra.mxu0 %v538
    %540 = vmatprep.subr.mxu0 0.0
    %v541 = vand.u32 %v45, 4294901760
    %v542 = vsub.f32 %v45, %v541
    %543 = vmatpush1.msra.mxu0 %v542
    %544 = vmatprep.subr.mxu0 0.0
    %v545 = vand.u32 %v44, 4294901760
    %v546 = vsub.f32 %v44, %v545
    %547 = vmatpush1.msra.mxu0 %v546
    %548 = vmatprep.subr.mxu0 0.0
    %v549 = vand.u32 %v75, 4294901760
    %v550 = vsub.f32 %v75, %v549
    %551 = vmatpush2.msra.mxu0 %v550
    %552 = vmatprep.subr.mxu0 0.0
    %v553 = vand.u32 %v74, 4294901760
    %v554 = vsub.f32 %v74, %v553
    %555 = vmatpush2.msra.mxu0 %v554
    %556 = vmatprep.subr.mxu0 0.0
    %v557 = vand.u32 %v73, 4294901760
    %v558 = vsub.f32 %v73, %v557
    %559 = vmatpush2.msra.mxu0 %v558
    %560 = vmatprep.subr.mxu0 0.0
    %v561 = vand.u32 %v72, 4294901760
    %v562 = vsub.f32 %v72, %v561
    %563 = vmatpush2.msra.mxu0 %v562
    %564 = vmatprep.subr.mxu0 0.0
    %v565 = vand.u32 %v71, 4294901760
    %v566 = vsub.f32 %v71, %v565
    %567 = vmatpush2.msra.mxu0 %v566
    %568 = vmatprep.subr.mxu0 0.0
    %v569 = vand.u32 %v70, 4294901760
    %v570 = vsub.f32 %v70, %v569
    %571 = vmatpush2.msra.mxu0 %v570
    %572 = vmatprep.subr.mxu0 0.0
    %v573 = vand.u32 %v69, 4294901760
    %v574 = vsub.f32 %v69, %v573
    %575 = vmatpush2.msra.mxu0 %v574
    %576 = vmatprep.subr.mxu0 0.0
    %v577 = vand.u32 %v68, 4294901760
    %v578 = vsub.f32 %v68, %v577
    %579 = vmatpush2.msra.mxu0 %v578
    %580 = vmatprep.subr.mxu0 0.0
    %v581 = vand.u32 %v67, 4294901760
    %v582 = vsub.f32 %v67, %v581
    %583 = vmatpush2.msra.mxu0 %v582
    %584 = vmatprep.subr.mxu0 0.0
    %v585 = vand.u32 %v66, 4294901760
    %v586 = vsub.f32 %v66, %v585
    %587 = vmatpush2.msra.mxu0 %v586
    %588 = vmatprep.subr.mxu0 0.0
    %v589 = vand.u32 %v65, 4294901760
    %v590 = vsub.f32 %v65, %v589
    %591 = vmatpush2.msra.mxu0 %v590
    %592 = vmatprep.subr.mxu0 0.0
    %v593 = vand.u32 %v64, 4294901760
    %v594 = vsub.f32 %v64, %v593
    %595 = vmatpush2.msra.mxu0 %v594
    %596 = vmatprep.subr.mxu0 0.0
    %v597 = vand.u32 %v63, 4294901760
    %v598 = vsub.f32 %v63, %v597
    %599 = vmatpush2.msra.mxu0 %v598
    %600 = vmatprep.subr.mxu0 0.0
    %v601 = vand.u32 %v62, 4294901760
    %v602 = vsub.f32 %v62, %v601
    %603 = vmatpush2.msra.mxu0 %v602
    %604 = vmatprep.subr.mxu0 0.0
    %v605 = vand.u32 %v61, 4294901760
    %v606 = vsub.f32 %v61, %v605
    %607 = vmatpush2.msra.mxu0 %v606
    %608 = vmatprep.subr.mxu0 0.0
    %v609 = vand.u32 %v60, 4294901760
    %v610 = vsub.f32 %v60, %v609
    %611 = vmatpush2.msra.mxu0 %v610
    %v612 = vand.u32 %v39, 4294901760
    %v613 = vsub.f32 %v39, %v612
    %614 = vmatprep.mubr.f32.mxu0 %v613
    %v615 = vand.u32 %v38, 4294901760
    %v616 = vsub.f32 %v38, %v615
    %617 = vmatmul.mubr.f32.gmra.mxu0 %v616
    %v618 = vpop.f32.mrf.mxu0
    %v619 = vadd.f32 %v481, %v618
    %v620 = vpop.f32.mrf.mxu0
    %621 = vdwg.mxu0
    %622 = vmatprep.subr.mxu0 0.0
    %v623 = vand.u32 %v59, 4294901760
    %624 = vmatpush1.msra.mxu0 %v623
    %625 = vmatprep.subr.mxu0 0.0
    %v626 = vand.u32 %v58, 4294901760
    %627 = vmatpush1.msra.mxu0 %v626
    %628 = vmatprep.subr.mxu0 0.0
    %v629 = vand.u32 %v57, 4294901760
    %630 = vmatpush1.msra.mxu0 %v629
    %631 = vmatprep.subr.mxu0 0.0
    %v632 = vand.u32 %v56, 4294901760
    %633 = vmatpush1.msra.mxu0 %v632
    %634 = vmatprep.subr.mxu0 0.0
    %v635 = vand.u32 %v55, 4294901760
    %636 = vmatpush1.msra.mxu0 %v635
    %637 = vmatprep.subr.mxu0 0.0
    %v638 = vand.u32 %v54, 4294901760
    %639 = vmatpush1.msra.mxu0 %v638
    %640 = vmatprep.subr.mxu0 0.0
    %v641 = vand.u32 %v53, 4294901760
    %642 = vmatpush1.msra.mxu0 %v641
    %643 = vmatprep.subr.mxu0 0.0
    %v644 = vand.u32 %v52, 4294901760
    %645 = vmatpush1.msra.mxu0 %v644
    %646 = vmatprep.subr.mxu0 0.0
    %v647 = vand.u32 %v51, 4294901760
    %648 = vmatpush1.msra.mxu0 %v647
    %649 = vmatprep.subr.mxu0 0.0
    %v650 = vand.u32 %v50, 4294901760
    %651 = vmatpush1.msra.mxu0 %v650
    %652 = vmatprep.subr.mxu0 0.0
    %v653 = vand.u32 %v49, 4294901760
    %654 = vmatpush1.msra.mxu0 %v653
    %655 = vmatprep.subr.mxu0 0.0
    %v656 = vand.u32 %v48, 4294901760
    %657 = vmatpush1.msra.mxu0 %v656
    %658 = vmatprep.subr.mxu0 0.0
    %v659 = vand.u32 %v47, 4294901760
    %660 = vmatpush1.msra.mxu0 %v659
    %661 = vmatprep.subr.mxu0 0.0
    %v662 = vand.u32 %v46, 4294901760
    %663 = vmatpush1.msra.mxu0 %v662
    %664 = vmatprep.subr.mxu0 0.0
    %v665 = vand.u32 %v45, 4294901760
    %666 = vmatpush1.msra.mxu0 %v665
    %667 = vmatprep.subr.mxu0 0.0
    %v668 = vand.u32 %v44, 4294901760
    %669 = vmatpush1.msra.mxu0 %v668
    %670 = vmatprep.subr.mxu0 0.0
    %v671 = vand.u32 %v75, 4294901760
    %672 = vmatpush2.msra.mxu0 %v671
    %673 = vmatprep.subr.mxu0 0.0
    %v674 = vand.u32 %v74, 4294901760
    %675 = vmatpush2.msra.mxu0 %v674
    %676 = vmatprep.subr.mxu0 0.0
    %v677 = vand.u32 %v73, 4294901760
    %678 = vmatpush2.msra.mxu0 %v677
    %679 = vmatprep.subr.mxu0 0.0
    %v680 = vand.u32 %v72, 4294901760
    %681 = vmatpush2.msra.mxu0 %v680
    %682 = vmatprep.subr.mxu0 0.0
    %v683 = vand.u32 %v71, 4294901760
    %684 = vmatpush2.msra.mxu0 %v683
    %685 = vmatprep.subr.mxu0 0.0
    %v686 = vand.u32 %v70, 4294901760
    %687 = vmatpush2.msra.mxu0 %v686
    %688 = vmatprep.subr.mxu0 0.0
    %v689 = vand.u32 %v69, 4294901760
    %690 = vmatpush2.msra.mxu0 %v689
    %691 = vmatprep.subr.mxu0 0.0
    %v692 = vand.u32 %v68, 4294901760
    %693 = vmatpush2.msra.mxu0 %v692
    %694 = vmatprep.subr.mxu0 0.0
    %v695 = vand.u32 %v67, 4294901760
    %696 = vmatpush2.msra.mxu0 %v695
    %697 = vmatprep.subr.mxu0 0.0
    %v698 = vand.u32 %v66, 4294901760
    %699 = vmatpush2.msra.mxu0 %v698
    %700 = vmatprep.subr.mxu0 0.0
    %v701 = vand.u32 %v65, 4294901760
    %702 = vmatpush2.msra.mxu0 %v701
    %703 = vmatprep.subr.mxu0 0.0
    %v704 = vand.u32 %v64, 4294901760
    %705 = vmatpush2.msra.mxu0 %v704
    %706 = vmatprep.subr.mxu0 0.0
    %v707 = vand.u32 %v63, 4294901760
    %708 = vmatpush2.msra.mxu0 %v707
    %709 = vmatprep.subr.mxu0 0.0
    %v710 = vand.u32 %v62, 4294901760
    %711 = vmatpush2.msra.mxu0 %v710
    %712 = vmatprep.subr.mxu0 0.0
    %v713 = vand.u32 %v61, 4294901760
    %714 = vmatpush2.msra.mxu0 %v713
    %715 = vmatprep.subr.mxu0 0.0
    %v716 = vand.u32 %v60, 4294901760
    %717 = vmatpush2.msra.mxu0 %v716
    %v718 = vand.u32 %v39, 4294901760
    %v719 = vsub.f32 %v39, %v718
    %v720 = vand.u32 %v719, 4294901760
    %721 = vmatprep.mubr.f32.mxu0 %v720
    %v722 = vand.u32 %v38, 4294901760
    %v723 = vsub.f32 %v38, %v722
    %v724 = vand.u32 %v723, 4294901760
    %725 = vmatmul.mubr.f32.gmra.mxu0 %v724
    %v726 = vpop.f32.mrf.mxu0
    %v727 = vadd.f32 %v619, %v726
    %v728 = vpop.f32.mrf.mxu0
    %729 = vdwg.mxu0
    %730 = vmatprep.subr.mxu0 0.0
    %v731 = vand.u32 %v59, 4294901760
    %v732 = vsub.f32 %v59, %v731
    %v733 = vand.u32 %v732, 4294901760
    %734 = vmatpush1.msra.mxu0 %v733
    %735 = vmatprep.subr.mxu0 0.0
    %v736 = vand.u32 %v58, 4294901760
    %v737 = vsub.f32 %v58, %v736
    %v738 = vand.u32 %v737, 4294901760
    %739 = vmatpush1.msra.mxu0 %v738
    %740 = vmatprep.subr.mxu0 0.0
    %v741 = vand.u32 %v57, 4294901760
    %v742 = vsub.f32 %v57, %v741
    %v743 = vand.u32 %v742, 4294901760
    %744 = vmatpush1.msra.mxu0 %v743
    %745 = vmatprep.subr.mxu0 0.0
    %v746 = vand.u32 %v56, 4294901760
    %v747 = vsub.f32 %v56, %v746
    %v748 = vand.u32 %v747, 4294901760
    %749 = vmatpush1.msra.mxu0 %v748
    %750 = vmatprep.subr.mxu0 0.0
    %v751 = vand.u32 %v55, 4294901760
    %v752 = vsub.f32 %v55, %v751
    %v753 = vand.u32 %v752, 4294901760
    %754 = vmatpush1.msra.mxu0 %v753
    %755 = vmatprep.subr.mxu0 0.0
    %v756 = vand.u32 %v54, 4294901760
    %v757 = vsub.f32 %v54, %v756
    %v758 = vand.u32 %v757, 4294901760
    %759 = vmatpush1.msra.mxu0 %v758
    %760 = vmatprep.subr.mxu0 0.0
    %v761 = vand.u32 %v53, 4294901760
    %v762 = vsub.f32 %v53, %v761
    %v763 = vand.u32 %v762, 4294901760
    %764 = vmatpush1.msra.mxu0 %v763
    %765 = vmatprep.subr.mxu0 0.0
    %v766 = vand.u32 %v52, 4294901760
    %v767 = vsub.f32 %v52, %v766
    %v768 = vand.u32 %v767, 4294901760
    %769 = vmatpush1.msra.mxu0 %v768
    %770 = vmatprep.subr.mxu0 0.0
    %v771 = vand.u32 %v51, 4294901760
    %v772 = vsub.f32 %v51, %v771
    %v773 = vand.u32 %v772, 4294901760
    %774 = vmatpush1.msra.mxu0 %v773
    %775 = vmatprep.subr.mxu0 0.0
    %v776 = vand.u32 %v50, 4294901760
    %v777 = vsub.f32 %v50, %v776
    %v778 = vand.u32 %v777, 4294901760
    %779 = vmatpush1.msra.mxu0 %v778
    %780 = vmatprep.subr.mxu0 0.0
    %v781 = vand.u32 %v49, 4294901760
    %v782 = vsub.f32 %v49, %v781
    %v783 = vand.u32 %v782, 4294901760
    %784 = vmatpush1.msra.mxu0 %v783
    %785 = vmatprep.subr.mxu0 0.0
    %v786 = vand.u32 %v48, 4294901760
    %v787 = vsub.f32 %v48, %v786
    %v788 = vand.u32 %v787, 4294901760
    %789 = vmatpush1.msra.mxu0 %v788
    %790 = vmatprep.subr.mxu0 0.0
    %v791 = vand.u32 %v47, 4294901760
    %v792 = vsub.f32 %v47, %v791
    %v793 = vand.u32 %v792, 4294901760
    %794 = vmatpush1.msra.mxu0 %v793
    %795 = vmatprep.subr.mxu0 0.0
    %v796 = vand.u32 %v46, 4294901760
    %v797 = vsub.f32 %v46, %v796
    %v798 = vand.u32 %v797, 4294901760
    %799 = vmatpush1.msra.mxu0 %v798
    %800 = vmatprep.subr.mxu0 0.0
    %v801 = vand.u32 %v45, 4294901760
    %v802 = vsub.f32 %v45, %v801
    %v803 = vand.u32 %v802, 4294901760
    %804 = vmatpush1.msra.mxu0 %v803
    %805 = vmatprep.subr.mxu0 0.0
    %v806 = vand.u32 %v44, 4294901760
    %v807 = vsub.f32 %v44, %v806
    %v808 = vand.u32 %v807, 4294901760
    %809 = vmatpush1.msra.mxu0 %v808
    %810 = vmatprep.subr.mxu0 0.0
    %v811 = vand.u32 %v75, 4294901760
    %v812 = vsub.f32 %v75, %v811
    %v813 = vand.u32 %v812, 4294901760
    %814 = vmatpush2.msra.mxu0 %v813
    %815 = vmatprep.subr.mxu0 0.0
    %v816 = vand.u32 %v74, 4294901760
    %v817 = vsub.f32 %v74, %v816
    %v818 = vand.u32 %v817, 4294901760
    %819 = vmatpush2.msra.mxu0 %v818
    %820 = vmatprep.subr.mxu0 0.0
    %v821 = vand.u32 %v73, 4294901760
    %v822 = vsub.f32 %v73, %v821
    %v823 = vand.u32 %v822, 4294901760
    %824 = vmatpush2.msra.mxu0 %v823
    %825 = vmatprep.subr.mxu0 0.0
    %v826 = vand.u32 %v72, 4294901760
    %v827 = vsub.f32 %v72, %v826
    %v828 = vand.u32 %v827, 4294901760
    %829 = vmatpush2.msra.mxu0 %v828
    %830 = vmatprep.subr.mxu0 0.0
    %v831 = vand.u32 %v71, 4294901760
    %v832 = vsub.f32 %v71, %v831
    %v833 = vand.u32 %v832, 4294901760
    %834 = vmatpush2.msra.mxu0 %v833
    %835 = vmatprep.subr.mxu0 0.0
    %v836 = vand.u32 %v70, 4294901760
    %v837 = vsub.f32 %v70, %v836
    %v838 = vand.u32 %v837, 4294901760
    %839 = vmatpush2.msra.mxu0 %v838
    %840 = vmatprep.subr.mxu0 0.0
    %v841 = vand.u32 %v69, 4294901760
    %v842 = vsub.f32 %v69, %v841
    %v843 = vand.u32 %v842, 4294901760
    %844 = vmatpush2.msra.mxu0 %v843
    %845 = vmatprep.subr.mxu0 0.0
    %v846 = vand.u32 %v68, 4294901760
    %v847 = vsub.f32 %v68, %v846
    %v848 = vand.u32 %v847, 4294901760
    %849 = vmatpush2.msra.mxu0 %v848
    %850 = vmatprep.subr.mxu0 0.0
    %v851 = vand.u32 %v67, 4294901760
    %v852 = vsub.f32 %v67, %v851
    %v853 = vand.u32 %v852, 4294901760
    %854 = vmatpush2.msra.mxu0 %v853
    %855 = vmatprep.subr.mxu0 0.0
    %v856 = vand.u32 %v66, 4294901760
    %v857 = vsub.f32 %v66, %v856
    %v858 = vand.u32 %v857, 4294901760
    %859 = vmatpush2.msra.mxu0 %v858
    %860 = vmatprep.subr.mxu0 0.0
    %v861 = vand.u32 %v65, 4294901760
    %v862 = vsub.f32 %v65, %v861
    %v863 = vand.u32 %v862, 4294901760
    %864 = vmatpush2.msra.mxu0 %v863
    %865 = vmatprep.subr.mxu0 0.0
    %v866 = vand.u32 %v64, 4294901760
    %v867 = vsub.f32 %v64, %v866
    %v868 = vand.u32 %v867, 4294901760
    %869 = vmatpush2.msra.mxu0 %v868
    %870 = vmatprep.subr.mxu0 0.0
    %v871 = vand.u32 %v63, 4294901760
    %v872 = vsub.f32 %v63, %v871
    %v873 = vand.u32 %v872, 4294901760
    %874 = vmatpush2.msra.mxu0 %v873
    %875 = vmatprep.subr.mxu0 0.0
    %v876 = vand.u32 %v62, 4294901760
    %v877 = vsub.f32 %v62, %v876
    %v878 = vand.u32 %v877, 4294901760
    %879 = vmatpush2.msra.mxu0 %v878
    %880 = vmatprep.subr.mxu0 0.0
    %v881 = vand.u32 %v61, 4294901760
    %v882 = vsub.f32 %v61, %v881
    %v883 = vand.u32 %v882, 4294901760
    %884 = vmatpush2.msra.mxu0 %v883
    %885 = vmatprep.subr.mxu0 0.0
    %v886 = vand.u32 %v60, 4294901760
    %v887 = vsub.f32 %v60, %v886
    %v888 = vand.u32 %v887, 4294901760
    %889 = vmatpush2.msra.mxu0 %v888
    %v890 = vand.u32 %v39, 4294901760
    %891 = vmatprep.mubr.f32.mxu0 %v890
    %v892 = vand.u32 %v38, 4294901760
    %893 = vmatmul.mubr.f32.gmra.mxu0 %v892
    %v894 = vpop.f32.mrf.mxu0
    %v895 = vadd.f32 %v727, %v894
    %v896 = vpop.f32.mrf.mxu0
    %897 = vdwg.mxu0
    %898 = vmatprep.subr.mxu0 0.0
    %v899 = vand.u32 %v59, 4294901760
    %900 = vmatpush1.msra.mxu0 %v899
    %901 = vmatprep.subr.mxu0 0.0
    %v902 = vand.u32 %v58, 4294901760
    %903 = vmatpush1.msra.mxu0 %v902
    %904 = vmatprep.subr.mxu0 0.0
    %v905 = vand.u32 %v57, 4294901760
    %906 = vmatpush1.msra.mxu0 %v905
    %907 = vmatprep.subr.mxu0 0.0
    %v908 = vand.u32 %v56, 4294901760
    %909 = vmatpush1.msra.mxu0 %v908
    %910 = vmatprep.subr.mxu0 0.0
    %v911 = vand.u32 %v55, 4294901760
    %912 = vmatpush1.msra.mxu0 %v911
    %913 = vmatprep.subr.mxu0 0.0
    %v914 = vand.u32 %v54, 4294901760
    %915 = vmatpush1.msra.mxu0 %v914
    %916 = vmatprep.subr.mxu0 0.0
    %v917 = vand.u32 %v53, 4294901760
    %918 = vmatpush1.msra.mxu0 %v917
    %919 = vmatprep.subr.mxu0 0.0
    %v920 = vand.u32 %v52, 4294901760
    %921 = vmatpush1.msra.mxu0 %v920
    %922 = vmatprep.subr.mxu0 0.0
    %v923 = vand.u32 %v51, 4294901760
    %924 = vmatpush1.msra.mxu0 %v923
    %925 = vmatprep.subr.mxu0 0.0
    %v926 = vand.u32 %v50, 4294901760
    %927 = vmatpush1.msra.mxu0 %v926
    %928 = vmatprep.subr.mxu0 0.0
    %v929 = vand.u32 %v49, 4294901760
    %930 = vmatpush1.msra.mxu0 %v929
    %931 = vmatprep.subr.mxu0 0.0
    %v932 = vand.u32 %v48, 4294901760
    %933 = vmatpush1.msra.mxu0 %v932
    %934 = vmatprep.subr.mxu0 0.0
    %v935 = vand.u32 %v47, 4294901760
    %936 = vmatpush1.msra.mxu0 %v935
    %937 = vmatprep.subr.mxu0 0.0
    %v938 = vand.u32 %v46, 4294901760
    %939 = vmatpush1.msra.mxu0 %v938
    %940 = vmatprep.subr.mxu0 0.0
    %v941 = vand.u32 %v45, 4294901760
    %942 = vmatpush1.msra.mxu0 %v941
    %943 = vmatprep.subr.mxu0 0.0
    %v944 = vand.u32 %v44, 4294901760
    %945 = vmatpush1.msra.mxu0 %v944
    %946 = vmatprep.subr.mxu0 0.0
    %v947 = vand.u32 %v75, 4294901760
    %948 = vmatpush2.msra.mxu0 %v947
    %949 = vmatprep.subr.mxu0 0.0
    %v950 = vand.u32 %v74, 4294901760
    %951 = vmatpush2.msra.mxu0 %v950
    %952 = vmatprep.subr.mxu0 0.0
    %v953 = vand.u32 %v73, 4294901760
    %954 = vmatpush2.msra.mxu0 %v953
    %955 = vmatprep.subr.mxu0 0.0
    %v956 = vand.u32 %v72, 4294901760
    %957 = vmatpush2.msra.mxu0 %v956
    %958 = vmatprep.subr.mxu0 0.0
    %v959 = vand.u32 %v71, 4294901760
    %960 = vmatpush2.msra.mxu0 %v959
    %961 = vmatprep.subr.mxu0 0.0
    %v962 = vand.u32 %v70, 4294901760
    %963 = vmatpush2.msra.mxu0 %v962
    %964 = vmatprep.subr.mxu0 0.0
    %v965 = vand.u32 %v69, 4294901760
    %966 = vmatpush2.msra.mxu0 %v965
    %967 = vmatprep.subr.mxu0 0.0
    %v968 = vand.u32 %v68, 4294901760
    %969 = vmatpush2.msra.mxu0 %v968
    %970 = vmatprep.subr.mxu0 0.0
    %v971 = vand.u32 %v67, 4294901760
    %972 = vmatpush2.msra.mxu0 %v971
    %973 = vmatprep.subr.mxu0 0.0
    %v974 = vand.u32 %v66, 4294901760
    %975 = vmatpush2.msra.mxu0 %v974
    %976 = vmatprep.subr.mxu0 0.0
    %v977 = vand.u32 %v65, 4294901760
    %978 = vmatpush2.msra.mxu0 %v977
    %979 = vmatprep.subr.mxu0 0.0
    %v980 = vand.u32 %v64, 4294901760
    %981 = vmatpush2.msra.mxu0 %v980
    %982 = vmatprep.subr.mxu0 0.0
    %v983 = vand.u32 %v63, 4294901760
    %984 = vmatpush2.msra.mxu0 %v983
    %985 = vmatprep.subr.mxu0 0.0
    %v986 = vand.u32 %v62, 4294901760
    %987 = vmatpush2.msra.mxu0 %v986
    %988 = vmatprep.subr.mxu0 0.0
    %v989 = vand.u32 %v61, 4294901760
    %990 = vmatpush2.msra.mxu0 %v989
    %991 = vmatprep.subr.mxu0 0.0
    %v992 = vand.u32 %v60, 4294901760
    %993 = vmatpush2.msra.mxu0 %v992
    %v994 = vand.u32 %v39, 4294901760
    %995 = vmatprep.mubr.f32.mxu0 %v994
    %v996 = vand.u32 %v38, 4294901760
    %997 = vmatmul.mubr.f32.gmra.mxu0 %v996
    %v998 = vpop.f32.mrf.mxu0
    %v999 = vadd.f32 %v895, %v998
    %v1000 = vpop.f32.mrf.mxu0
    %1001 = vdwg.mxu0
    %1002 = vmatprep.subr.mxu0 0.0
    %v1003 = vand.u32 %v91, 4294901760
    %1004 = vmatpush1.msra.mxu0 %v1003
    %1005 = vmatprep.subr.mxu0 0.0
    %v1006 = vand.u32 %v90, 4294901760
    %1007 = vmatpush1.msra.mxu0 %v1006
    %1008 = vmatprep.subr.mxu0 0.0
    %v1009 = vand.u32 %v89, 4294901760
    %1010 = vmatpush1.msra.mxu0 %v1009
    %1011 = vmatprep.subr.mxu0 0.0
    %v1012 = vand.u32 %v88, 4294901760
    %1013 = vmatpush1.msra.mxu0 %v1012
    %1014 = vmatprep.subr.mxu0 0.0
    %v1015 = vand.u32 %v87, 4294901760
    %1016 = vmatpush1.msra.mxu0 %v1015
    %1017 = vmatprep.subr.mxu0 0.0
    %v1018 = vand.u32 %v86, 4294901760
    %1019 = vmatpush1.msra.mxu0 %v1018
    %1020 = vmatprep.subr.mxu0 0.0
    %v1021 = vand.u32 %v85, 4294901760
    %1022 = vmatpush1.msra.mxu0 %v1021
    %1023 = vmatprep.subr.mxu0 0.0
    %v1024 = vand.u32 %v84, 4294901760
    %1025 = vmatpush1.msra.mxu0 %v1024
    %1026 = vmatprep.subr.mxu0 0.0
    %v1027 = vand.u32 %v83, 4294901760
    %1028 = vmatpush1.msra.mxu0 %v1027
    %1029 = vmatprep.subr.mxu0 0.0
    %v1030 = vand.u32 %v82, 4294901760
    %1031 = vmatpush1.msra.mxu0 %v1030
    %1032 = vmatprep.subr.mxu0 0.0
    %v1033 = vand.u32 %v81, 4294901760
    %1034 = vmatpush1.msra.mxu0 %v1033
    %1035 = vmatprep.subr.mxu0 0.0
    %v1036 = vand.u32 %v80, 4294901760
    %1037 = vmatpush1.msra.mxu0 %v1036
    %1038 = vmatprep.subr.mxu0 0.0
    %v1039 = vand.u32 %v79, 4294901760
    %1040 = vmatpush1.msra.mxu0 %v1039
    %1041 = vmatprep.subr.mxu0 0.0
    %v1042 = vand.u32 %v78, 4294901760
    %1043 = vmatpush1.msra.mxu0 %v1042
    %1044 = vmatprep.subr.mxu0 0.0
    %v1045 = vand.u32 %v77, 4294901760
    %1046 = vmatpush1.msra.mxu0 %v1045
    %1047 = vmatprep.subr.mxu0 0.0
    %v1048 = vand.u32 %v76, 4294901760
    %1049 = vmatpush1.msra.mxu0 %v1048
    %1050 = vmatprep.subr.mxu0 0.0
    %v1051 = vand.u32 %v107, 4294901760
    %1052 = vmatpush2.msra.mxu0 %v1051
    %1053 = vmatprep.subr.mxu0 0.0
    %v1054 = vand.u32 %v106, 4294901760
    %1055 = vmatpush2.msra.mxu0 %v1054
    %1056 = vmatprep.subr.mxu0 0.0
    %v1057 = vand.u32 %v105, 4294901760
    %1058 = vmatpush2.msra.mxu0 %v1057
    %1059 = vmatprep.subr.mxu0 0.0
    %v1060 = vand.u32 %v104, 4294901760
    %1061 = vmatpush2.msra.mxu0 %v1060
    %1062 = vmatprep.subr.mxu0 0.0
    %v1063 = vand.u32 %v103, 4294901760
    %1064 = vmatpush2.msra.mxu0 %v1063
    %1065 = vmatprep.subr.mxu0 0.0
    %v1066 = vand.u32 %v102, 4294901760
    %1067 = vmatpush2.msra.mxu0 %v1066
    %1068 = vmatprep.subr.mxu0 0.0
    %v1069 = vand.u32 %v101, 4294901760
    %1070 = vmatpush2.msra.mxu0 %v1069
    %1071 = vmatprep.subr.mxu0 0.0
    %v1072 = vand.u32 %v100, 4294901760
    %1073 = vmatpush2.msra.mxu0 %v1072
    %1074 = vmatprep.subr.mxu0 0.0
    %v1075 = vand.u32 %v99, 4294901760
    %1076 = vmatpush2.msra.mxu0 %v1075
    %1077 = vmatprep.subr.mxu0 0.0
    %v1078 = vand.u32 %v98, 4294901760
    %1079 = vmatpush2.msra.mxu0 %v1078
    %1080 = vmatprep.subr.mxu0 0.0
    %v1081 = vand.u32 %v97, 4294901760
    %1082 = vmatpush2.msra.mxu0 %v1081
    %1083 = vmatprep.subr.mxu0 0.0
    %v1084 = vand.u32 %v96, 4294901760
    %1085 = vmatpush2.msra.mxu0 %v1084
    %1086 = vmatprep.subr.mxu0 0.0
    %v1087 = vand.u32 %v95, 4294901760
    %1088 = vmatpush2.msra.mxu0 %v1087
    %1089 = vmatprep.subr.mxu0 0.0
    %v1090 = vand.u32 %v94, 4294901760
    %1091 = vmatpush2.msra.mxu0 %v1090
    %1092 = vmatprep.subr.mxu0 0.0
    %v1093 = vand.u32 %v93, 4294901760
    %1094 = vmatpush2.msra.mxu0 %v1093
    %1095 = vmatprep.subr.mxu0 0.0
    %v1096 = vand.u32 %v92, 4294901760
    %1097 = vmatpush2.msra.mxu0 %v1096
    %v1098 = vand.u32 %v41, 4294901760
    %v1099 = vsub.f32 %v41, %v1098
    %v1100 = vand.u32 %v1099, 4294901760
    %v1101 = vsub.f32 %v1099, %v1100
    %v1102 = vand.u32 %v1101, 4294901760
    %1103 = vmatprep.mubr.f32.mxu0 %v1102
    %v1104 = vand.u32 %v40, 4294901760
    %v1105 = vsub.f32 %v40, %v1104
    %v1106 = vand.u32 %v1105, 4294901760
    %v1107 = vsub.f32 %v1105, %v1106
    %v1108 = vand.u32 %v1107, 4294901760
    %1109 = vmatmul.mubr.f32.gmra.mxu0 %v1108
    %v1110 = vpop.f32.mrf.mxu0
    %v1111 = vadd.f32 %v999, %v1110
    %v1112 = vpop.f32.mrf.mxu0
    %1113 = vdwg.mxu0
    %1114 = vmatprep.subr.mxu0 0.0
    %v1115 = vand.u32 %v91, 4294901760
    %v1116 = vsub.f32 %v91, %v1115
    %v1117 = vand.u32 %v1116, 4294901760
    %v1118 = vsub.f32 %v1116, %v1117
    %v1119 = vand.u32 %v1118, 4294901760
    %1120 = vmatpush1.msra.mxu0 %v1119
    %1121 = vmatprep.subr.mxu0 0.0
    %v1122 = vand.u32 %v90, 4294901760
    %v1123 = vsub.f32 %v90, %v1122
    %v1124 = vand.u32 %v1123, 4294901760
    %v1125 = vsub.f32 %v1123, %v1124
    %v1126 = vand.u32 %v1125, 4294901760
    %1127 = vmatpush1.msra.mxu0 %v1126
    %1128 = vmatprep.subr.mxu0 0.0
    %v1129 = vand.u32 %v89, 4294901760
    %v1130 = vsub.f32 %v89, %v1129
    %v1131 = vand.u32 %v1130, 4294901760
    %v1132 = vsub.f32 %v1130, %v1131
    %v1133 = vand.u32 %v1132, 4294901760
    %1134 = vmatpush1.msra.mxu0 %v1133
    %1135 = vmatprep.subr.mxu0 0.0
    %v1136 = vand.u32 %v88, 4294901760
    %v1137 = vsub.f32 %v88, %v1136
    %v1138 = vand.u32 %v1137, 4294901760
    %v1139 = vsub.f32 %v1137, %v1138
    %v1140 = vand.u32 %v1139, 4294901760
    %1141 = vmatpush1.msra.mxu0 %v1140
    %1142 = vmatprep.subr.mxu0 0.0
    %v1143 = vand.u32 %v87, 4294901760
    %v1144 = vsub.f32 %v87, %v1143
    %v1145 = vand.u32 %v1144, 4294901760
    %v1146 = vsub.f32 %v1144, %v1145
    %v1147 = vand.u32 %v1146, 4294901760
    %1148 = vmatpush1.msra.mxu0 %v1147
    %1149 = vmatprep.subr.mxu0 0.0
    %v1150 = vand.u32 %v86, 4294901760
    %v1151 = vsub.f32 %v86, %v1150
    %v1152 = vand.u32 %v1151, 4294901760
    %v1153 = vsub.f32 %v1151, %v1152
    %v1154 = vand.u32 %v1153, 4294901760
    %1155 = vmatpush1.msra.mxu0 %v1154
    %1156 = vmatprep.subr.mxu0 0.0
    %v1157 = vand.u32 %v85, 4294901760
    %v1158 = vsub.f32 %v85, %v1157
    %v1159 = vand.u32 %v1158, 4294901760
    %v1160 = vsub.f32 %v1158, %v1159
    %v1161 = vand.u32 %v1160, 4294901760
    %1162 = vmatpush1.msra.mxu0 %v1161
    %1163 = vmatprep.subr.mxu0 0.0
    %v1164 = vand.u32 %v84, 4294901760
    %v1165 = vsub.f32 %v84, %v1164
    %v1166 = vand.u32 %v1165, 4294901760
    %v1167 = vsub.f32 %v1165, %v1166
    %v1168 = vand.u32 %v1167, 4294901760
    %1169 = vmatpush1.msra.mxu0 %v1168
    %1170 = vmatprep.subr.mxu0 0.0
    %v1171 = vand.u32 %v83, 4294901760
    %v1172 = vsub.f32 %v83, %v1171
    %v1173 = vand.u32 %v1172, 4294901760
    %v1174 = vsub.f32 %v1172, %v1173
    %v1175 = vand.u32 %v1174, 4294901760
    %1176 = vmatpush1.msra.mxu0 %v1175
    %1177 = vmatprep.subr.mxu0 0.0
    %v1178 = vand.u32 %v82, 4294901760
    %v1179 = vsub.f32 %v82, %v1178
    %v1180 = vand.u32 %v1179, 4294901760
    %v1181 = vsub.f32 %v1179, %v1180
    %v1182 = vand.u32 %v1181, 4294901760
    %1183 = vmatpush1.msra.mxu0 %v1182
    %1184 = vmatprep.subr.mxu0 0.0
    %v1185 = vand.u32 %v81, 4294901760
    %v1186 = vsub.f32 %v81, %v1185
    %v1187 = vand.u32 %v1186, 4294901760
    %v1188 = vsub.f32 %v1186, %v1187
    %v1189 = vand.u32 %v1188, 4294901760
    %1190 = vmatpush1.msra.mxu0 %v1189
    %1191 = vmatprep.subr.mxu0 0.0
    %v1192 = vand.u32 %v80, 4294901760
    %v1193 = vsub.f32 %v80, %v1192
    %v1194 = vand.u32 %v1193, 4294901760
    %v1195 = vsub.f32 %v1193, %v1194
    %v1196 = vand.u32 %v1195, 4294901760
    %1197 = vmatpush1.msra.mxu0 %v1196
    %1198 = vmatprep.subr.mxu0 0.0
    %v1199 = vand.u32 %v79, 4294901760
    %v1200 = vsub.f32 %v79, %v1199
    %v1201 = vand.u32 %v1200, 4294901760
    %v1202 = vsub.f32 %v1200, %v1201
    %v1203 = vand.u32 %v1202, 4294901760
    %1204 = vmatpush1.msra.mxu0 %v1203
    %1205 = vmatprep.subr.mxu0 0.0
    %v1206 = vand.u32 %v78, 4294901760
    %v1207 = vsub.f32 %v78, %v1206
    %v1208 = vand.u32 %v1207, 4294901760
    %v1209 = vsub.f32 %v1207, %v1208
    %v1210 = vand.u32 %v1209, 4294901760
    %1211 = vmatpush1.msra.mxu0 %v1210
    %1212 = vmatprep.subr.mxu0 0.0
    %v1213 = vand.u32 %v77, 4294901760
    %v1214 = vsub.f32 %v77, %v1213
    %v1215 = vand.u32 %v1214, 4294901760
    %v1216 = vsub.f32 %v1214, %v1215
    %v1217 = vand.u32 %v1216, 4294901760
    %1218 = vmatpush1.msra.mxu0 %v1217
    %1219 = vmatprep.subr.mxu0 0.0
    %v1220 = vand.u32 %v76, 4294901760
    %v1221 = vsub.f32 %v76, %v1220
    %v1222 = vand.u32 %v1221, 4294901760
    %v1223 = vsub.f32 %v1221, %v1222
    %v1224 = vand.u32 %v1223, 4294901760
    %1225 = vmatpush1.msra.mxu0 %v1224
    %1226 = vmatprep.subr.mxu0 0.0
    %v1227 = vand.u32 %v107, 4294901760
    %v1228 = vsub.f32 %v107, %v1227
    %v1229 = vand.u32 %v1228, 4294901760
    %v1230 = vsub.f32 %v1228, %v1229
    %v1231 = vand.u32 %v1230, 4294901760
    %1232 = vmatpush2.msra.mxu0 %v1231
    %1233 = vmatprep.subr.mxu0 0.0
    %v1234 = vand.u32 %v106, 4294901760
    %v1235 = vsub.f32 %v106, %v1234
    %v1236 = vand.u32 %v1235, 4294901760
    %v1237 = vsub.f32 %v1235, %v1236
    %v1238 = vand.u32 %v1237, 4294901760
    %1239 = vmatpush2.msra.mxu0 %v1238
    %1240 = vmatprep.subr.mxu0 0.0
    %v1241 = vand.u32 %v105, 4294901760
    %v1242 = vsub.f32 %v105, %v1241
    %v1243 = vand.u32 %v1242, 4294901760
    %v1244 = vsub.f32 %v1242, %v1243
    %v1245 = vand.u32 %v1244, 4294901760
    %1246 = vmatpush2.msra.mxu0 %v1245
    %1247 = vmatprep.subr.mxu0 0.0
    %v1248 = vand.u32 %v104, 4294901760
    %v1249 = vsub.f32 %v104, %v1248
    %v1250 = vand.u32 %v1249, 4294901760
    %v1251 = vsub.f32 %v1249, %v1250
    %v1252 = vand.u32 %v1251, 4294901760
    %1253 = vmatpush2.msra.mxu0 %v1252
    %1254 = vmatprep.subr.mxu0 0.0
    %v1255 = vand.u32 %v103, 4294901760
    %v1256 = vsub.f32 %v103, %v1255
    %v1257 = vand.u32 %v1256, 4294901760
    %v1258 = vsub.f32 %v1256, %v1257
    %v1259 = vand.u32 %v1258, 4294901760
    %1260 = vmatpush2.msra.mxu0 %v1259
    %1261 = vmatprep.subr.mxu0 0.0
    %v1262 = vand.u32 %v102, 4294901760
    %v1263 = vsub.f32 %v102, %v1262
    %v1264 = vand.u32 %v1263, 4294901760
    %v1265 = vsub.f32 %v1263, %v1264
    %v1266 = vand.u32 %v1265, 4294901760
    %1267 = vmatpush2.msra.mxu0 %v1266
    %1268 = vmatprep.subr.mxu0 0.0
    %v1269 = vand.u32 %v101, 4294901760
    %v1270 = vsub.f32 %v101, %v1269
    %v1271 = vand.u32 %v1270, 4294901760
    %v1272 = vsub.f32 %v1270, %v1271
    %v1273 = vand.u32 %v1272, 4294901760
    %1274 = vmatpush2.msra.mxu0 %v1273
    %1275 = vmatprep.subr.mxu0 0.0
    %v1276 = vand.u32 %v100, 4294901760
    %v1277 = vsub.f32 %v100, %v1276
    %v1278 = vand.u32 %v1277, 4294901760
    %v1279 = vsub.f32 %v1277, %v1278
    %v1280 = vand.u32 %v1279, 4294901760
    %1281 = vmatpush2.msra.mxu0 %v1280
    %1282 = vmatprep.subr.mxu0 0.0
    %v1283 = vand.u32 %v99, 4294901760
    %v1284 = vsub.f32 %v99, %v1283
    %v1285 = vand.u32 %v1284, 4294901760
    %v1286 = vsub.f32 %v1284, %v1285
    %v1287 = vand.u32 %v1286, 4294901760
    %1288 = vmatpush2.msra.mxu0 %v1287
    %1289 = vmatprep.subr.mxu0 0.0
    %v1290 = vand.u32 %v98, 4294901760
    %v1291 = vsub.f32 %v98, %v1290
    %v1292 = vand.u32 %v1291, 4294901760
    %v1293 = vsub.f32 %v1291, %v1292
    %v1294 = vand.u32 %v1293, 4294901760
    %1295 = vmatpush2.msra.mxu0 %v1294
    %1296 = vmatprep.subr.mxu0 0.0
    %v1297 = vand.u32 %v97, 4294901760
    %v1298 = vsub.f32 %v97, %v1297
    %v1299 = vand.u32 %v1298, 4294901760
    %v1300 = vsub.f32 %v1298, %v1299
    %v1301 = vand.u32 %v1300, 4294901760
    %1302 = vmatpush2.msra.mxu0 %v1301
    %1303 = vmatprep.subr.mxu0 0.0
    %v1304 = vand.u32 %v96, 4294901760
    %v1305 = vsub.f32 %v96, %v1304
    %v1306 = vand.u32 %v1305, 4294901760
    %v1307 = vsub.f32 %v1305, %v1306
    %v1308 = vand.u32 %v1307, 4294901760
    %1309 = vmatpush2.msra.mxu0 %v1308
    %1310 = vmatprep.subr.mxu0 0.0
    %v1311 = vand.u32 %v95, 4294901760
    %v1312 = vsub.f32 %v95, %v1311
    %v1313 = vand.u32 %v1312, 4294901760
    %v1314 = vsub.f32 %v1312, %v1313
    %v1315 = vand.u32 %v1314, 4294901760
    %1316 = vmatpush2.msra.mxu0 %v1315
    %1317 = vmatprep.subr.mxu0 0.0
    %v1318 = vand.u32 %v94, 4294901760
    %v1319 = vsub.f32 %v94, %v1318
    %v1320 = vand.u32 %v1319, 4294901760
    %v1321 = vsub.f32 %v1319, %v1320
    %v1322 = vand.u32 %v1321, 4294901760
    %1323 = vmatpush2.msra.mxu0 %v1322
    %1324 = vmatprep.subr.mxu0 0.0
    %v1325 = vand.u32 %v93, 4294901760
    %v1326 = vsub.f32 %v93, %v1325
    %v1327 = vand.u32 %v1326, 4294901760
    %v1328 = vsub.f32 %v1326, %v1327
    %v1329 = vand.u32 %v1328, 4294901760
    %1330 = vmatpush2.msra.mxu0 %v1329
    %1331 = vmatprep.subr.mxu0 0.0
    %v1332 = vand.u32 %v92, 4294901760
    %v1333 = vsub.f32 %v92, %v1332
    %v1334 = vand.u32 %v1333, 4294901760
    %v1335 = vsub.f32 %v1333, %v1334
    %v1336 = vand.u32 %v1335, 4294901760
    %1337 = vmatpush2.msra.mxu0 %v1336
    %v1338 = vand.u32 %v41, 4294901760
    %1339 = vmatprep.mubr.f32.mxu0 %v1338
    %v1340 = vand.u32 %v40, 4294901760
    %1341 = vmatmul.mubr.f32.gmra.mxu0 %v1340
    %v1342 = vpop.f32.mrf.mxu0
    %v1343 = vadd.f32 %v1111, %v1342
    %v1344 = vpop.f32.mrf.mxu0
    %1345 = vdwg.mxu0
    %1346 = vmatprep.subr.mxu0 0.0
    %v1347 = vand.u32 %v91, 4294901760
    %v1348 = vsub.f32 %v91, %v1347
    %1349 = vmatpush1.msra.mxu0 %v1348
    %1350 = vmatprep.subr.mxu0 0.0
    %v1351 = vand.u32 %v90, 4294901760
    %v1352 = vsub.f32 %v90, %v1351
    %1353 = vmatpush1.msra.mxu0 %v1352
    %1354 = vmatprep.subr.mxu0 0.0
    %v1355 = vand.u32 %v89, 4294901760
    %v1356 = vsub.f32 %v89, %v1355
    %1357 = vmatpush1.msra.mxu0 %v1356
    %1358 = vmatprep.subr.mxu0 0.0
    %v1359 = vand.u32 %v88, 4294901760
    %v1360 = vsub.f32 %v88, %v1359
    %1361 = vmatpush1.msra.mxu0 %v1360
    %1362 = vmatprep.subr.mxu0 0.0
    %v1363 = vand.u32 %v87, 4294901760
    %v1364 = vsub.f32 %v87, %v1363
    %1365 = vmatpush1.msra.mxu0 %v1364
    %1366 = vmatprep.subr.mxu0 0.0
    %v1367 = vand.u32 %v86, 4294901760
    %v1368 = vsub.f32 %v86, %v1367
    %1369 = vmatpush1.msra.mxu0 %v1368
    %1370 = vmatprep.subr.mxu0 0.0
    %v1371 = vand.u32 %v85, 4294901760
    %v1372 = vsub.f32 %v85, %v1371
    %1373 = vmatpush1.msra.mxu0 %v1372
    %1374 = vmatprep.subr.mxu0 0.0
    %v1375 = vand.u32 %v84, 4294901760
    %v1376 = vsub.f32 %v84, %v1375
    %1377 = vmatpush1.msra.mxu0 %v1376
    %1378 = vmatprep.subr.mxu0 0.0
    %v1379 = vand.u32 %v83, 4294901760
    %v1380 = vsub.f32 %v83, %v1379
    %1381 = vmatpush1.msra.mxu0 %v1380
    %1382 = vmatprep.subr.mxu0 0.0
    %v1383 = vand.u32 %v82, 4294901760
    %v1384 = vsub.f32 %v82, %v1383
    %1385 = vmatpush1.msra.mxu0 %v1384
    %1386 = vmatprep.subr.mxu0 0.0
    %v1387 = vand.u32 %v81, 4294901760
    %v1388 = vsub.f32 %v81, %v1387
    %1389 = vmatpush1.msra.mxu0 %v1388
    %1390 = vmatprep.subr.mxu0 0.0
    %v1391 = vand.u32 %v80, 4294901760
    %v1392 = vsub.f32 %v80, %v1391
    %1393 = vmatpush1.msra.mxu0 %v1392
    %1394 = vmatprep.subr.mxu0 0.0
    %v1395 = vand.u32 %v79, 4294901760
    %v1396 = vsub.f32 %v79, %v1395
    %1397 = vmatpush1.msra.mxu0 %v1396
    %1398 = vmatprep.subr.mxu0 0.0
    %v1399 = vand.u32 %v78, 4294901760
    %v1400 = vsub.f32 %v78, %v1399
    %1401 = vmatpush1.msra.mxu0 %v1400
    %1402 = vmatprep.subr.mxu0 0.0
    %v1403 = vand.u32 %v77, 4294901760
    %v1404 = vsub.f32 %v77, %v1403
    %1405 = vmatpush1.msra.mxu0 %v1404
    %1406 = vmatprep.subr.mxu0 0.0
    %v1407 = vand.u32 %v76, 4294901760
    %v1408 = vsub.f32 %v76, %v1407
    %1409 = vmatpush1.msra.mxu0 %v1408
    %1410 = vmatprep.subr.mxu0 0.0
    %v1411 = vand.u32 %v107, 4294901760
    %v1412 = vsub.f32 %v107, %v1411
    %1413 = vmatpush2.msra.mxu0 %v1412
    %1414 = vmatprep.subr.mxu0 0.0
    %v1415 = vand.u32 %v106, 4294901760
    %v1416 = vsub.f32 %v106, %v1415
    %1417 = vmatpush2.msra.mxu0 %v1416
    %1418 = vmatprep.subr.mxu0 0.0
    %v1419 = vand.u32 %v105, 4294901760
    %v1420 = vsub.f32 %v105, %v1419
    %1421 = vmatpush2.msra.mxu0 %v1420
    %1422 = vmatprep.subr.mxu0 0.0
    %v1423 = vand.u32 %v104, 4294901760
    %v1424 = vsub.f32 %v104, %v1423
    %1425 = vmatpush2.msra.mxu0 %v1424
    %1426 = vmatprep.subr.mxu0 0.0
    %v1427 = vand.u32 %v103, 4294901760
    %v1428 = vsub.f32 %v103, %v1427
    %1429 = vmatpush2.msra.mxu0 %v1428
    %1430 = vmatprep.subr.mxu0 0.0
    %v1431 = vand.u32 %v102, 4294901760
    %v1432 = vsub.f32 %v102, %v1431
    %1433 = vmatpush2.msra.mxu0 %v1432
    %1434 = vmatprep.subr.mxu0 0.0
    %v1435 = vand.u32 %v101, 4294901760
    %v1436 = vsub.f32 %v101, %v1435
    %1437 = vmatpush2.msra.mxu0 %v1436
    %1438 = vmatprep.subr.mxu0 0.0
    %v1439 = vand.u32 %v100, 4294901760
    %v1440 = vsub.f32 %v100, %v1439
    %1441 = vmatpush2.msra.mxu0 %v1440
    %1442 = vmatprep.subr.mxu0 0.0
    %v1443 = vand.u32 %v99, 4294901760
    %v1444 = vsub.f32 %v99, %v1443
    %1445 = vmatpush2.msra.mxu0 %v1444
    %1446 = vmatprep.subr.mxu0 0.0
    %v1447 = vand.u32 %v98, 4294901760
    %v1448 = vsub.f32 %v98, %v1447
    %1449 = vmatpush2.msra.mxu0 %v1448
    %1450 = vmatprep.subr.mxu0 0.0
    %v1451 = vand.u32 %v97, 4294901760
    %v1452 = vsub.f32 %v97, %v1451
    %1453 = vmatpush2.msra.mxu0 %v1452
    %1454 = vmatprep.subr.mxu0 0.0
    %v1455 = vand.u32 %v96, 4294901760
    %v1456 = vsub.f32 %v96, %v1455
    %1457 = vmatpush2.msra.mxu0 %v1456
    %1458 = vmatprep.subr.mxu0 0.0
    %v1459 = vand.u32 %v95, 4294901760
    %v1460 = vsub.f32 %v95, %v1459
    %1461 = vmatpush2.msra.mxu0 %v1460
    %1462 = vmatprep.subr.mxu0 0.0
    %v1463 = vand.u32 %v94, 4294901760
    %v1464 = vsub.f32 %v94, %v1463
    %1465 = vmatpush2.msra.mxu0 %v1464
    %1466 = vmatprep.subr.mxu0 0.0
    %v1467 = vand.u32 %v93, 4294901760
    %v1468 = vsub.f32 %v93, %v1467
    %1469 = vmatpush2.msra.mxu0 %v1468
    %1470 = vmatprep.subr.mxu0 0.0
    %v1471 = vand.u32 %v92, 4294901760
    %v1472 = vsub.f32 %v92, %v1471
    %1473 = vmatpush2.msra.mxu0 %v1472
    %v1474 = vand.u32 %v41, 4294901760
    %v1475 = vsub.f32 %v41, %v1474
    %1476 = vmatprep.mubr.f32.mxu0 %v1475
    %v1477 = vand.u32 %v40, 4294901760
    %v1478 = vsub.f32 %v40, %v1477
    %1479 = vmatmul.mubr.f32.gmra.mxu0 %v1478
    %v1480 = vpop.f32.mrf.mxu0
    %v1481 = vadd.f32 %v1343, %v1480
    %v1482 = vpop.f32.mrf.mxu0
    %1483 = vdwg.mxu0
    %1484 = vmatprep.subr.mxu0 0.0
    %v1485 = vand.u32 %v91, 4294901760
    %1486 = vmatpush1.msra.mxu0 %v1485
    %1487 = vmatprep.subr.mxu0 0.0
    %v1488 = vand.u32 %v90, 4294901760
    %1489 = vmatpush1.msra.mxu0 %v1488
    %1490 = vmatprep.subr.mxu0 0.0
    %v1491 = vand.u32 %v89, 4294901760
    %1492 = vmatpush1.msra.mxu0 %v1491
    %1493 = vmatprep.subr.mxu0 0.0
    %v1494 = vand.u32 %v88, 4294901760
    %1495 = vmatpush1.msra.mxu0 %v1494
    %1496 = vmatprep.subr.mxu0 0.0
    %v1497 = vand.u32 %v87, 4294901760
    %1498 = vmatpush1.msra.mxu0 %v1497
    %1499 = vmatprep.subr.mxu0 0.0
    %v1500 = vand.u32 %v86, 4294901760
    %1501 = vmatpush1.msra.mxu0 %v1500
    %1502 = vmatprep.subr.mxu0 0.0
    %v1503 = vand.u32 %v85, 4294901760
    %1504 = vmatpush1.msra.mxu0 %v1503
    %1505 = vmatprep.subr.mxu0 0.0
    %v1506 = vand.u32 %v84, 4294901760
    %1507 = vmatpush1.msra.mxu0 %v1506
    %1508 = vmatprep.subr.mxu0 0.0
    %v1509 = vand.u32 %v83, 4294901760
    %1510 = vmatpush1.msra.mxu0 %v1509
    %1511 = vmatprep.subr.mxu0 0.0
    %v1512 = vand.u32 %v82, 4294901760
    %1513 = vmatpush1.msra.mxu0 %v1512
    %1514 = vmatprep.subr.mxu0 0.0
    %v1515 = vand.u32 %v81, 4294901760
    %1516 = vmatpush1.msra.mxu0 %v1515
    %1517 = vmatprep.subr.mxu0 0.0
    %v1518 = vand.u32 %v80, 4294901760
    %1519 = vmatpush1.msra.mxu0 %v1518
    %1520 = vmatprep.subr.mxu0 0.0
    %v1521 = vand.u32 %v79, 4294901760
    %1522 = vmatpush1.msra.mxu0 %v1521
    %1523 = vmatprep.subr.mxu0 0.0
    %v1524 = vand.u32 %v78, 4294901760
    %1525 = vmatpush1.msra.mxu0 %v1524
    %1526 = vmatprep.subr.mxu0 0.0
    %v1527 = vand.u32 %v77, 4294901760
    %1528 = vmatpush1.msra.mxu0 %v1527
    %1529 = vmatprep.subr.mxu0 0.0
    %v1530 = vand.u32 %v76, 4294901760
    %1531 = vmatpush1.msra.mxu0 %v1530
    %1532 = vmatprep.subr.mxu0 0.0
    %v1533 = vand.u32 %v107, 4294901760
    %1534 = vmatpush2.msra.mxu0 %v1533
    %1535 = vmatprep.subr.mxu0 0.0
    %v1536 = vand.u32 %v106, 4294901760
    %1537 = vmatpush2.msra.mxu0 %v1536
    %1538 = vmatprep.subr.mxu0 0.0
    %v1539 = vand.u32 %v105, 4294901760
    %1540 = vmatpush2.msra.mxu0 %v1539
    %1541 = vmatprep.subr.mxu0 0.0
    %v1542 = vand.u32 %v104, 4294901760
    %1543 = vmatpush2.msra.mxu0 %v1542
    %1544 = vmatprep.subr.mxu0 0.0
    %v1545 = vand.u32 %v103, 4294901760
    %1546 = vmatpush2.msra.mxu0 %v1545
    %1547 = vmatprep.subr.mxu0 0.0
    %v1548 = vand.u32 %v102, 4294901760
    %1549 = vmatpush2.msra.mxu0 %v1548
    %1550 = vmatprep.subr.mxu0 0.0
    %v1551 = vand.u32 %v101, 4294901760
    %1552 = vmatpush2.msra.mxu0 %v1551
    %1553 = vmatprep.subr.mxu0 0.0
    %v1554 = vand.u32 %v100, 4294901760
    %1555 = vmatpush2.msra.mxu0 %v1554
    %1556 = vmatprep.subr.mxu0 0.0
    %v1557 = vand.u32 %v99, 4294901760
    %1558 = vmatpush2.msra.mxu0 %v1557
    %1559 = vmatprep.subr.mxu0 0.0
    %v1560 = vand.u32 %v98, 4294901760
    %1561 = vmatpush2.msra.mxu0 %v1560
    %1562 = vmatprep.subr.mxu0 0.0
    %v1563 = vand.u32 %v97, 4294901760
    %1564 = vmatpush2.msra.mxu0 %v1563
    %1565 = vmatprep.subr.mxu0 0.0
    %v1566 = vand.u32 %v96, 4294901760
    %1567 = vmatpush2.msra.mxu0 %v1566
    %1568 = vmatprep.subr.mxu0 0.0
    %v1569 = vand.u32 %v95, 4294901760
    %1570 = vmatpush2.msra.mxu0 %v1569
    %1571 = vmatprep.subr.mxu0 0.0
    %v1572 = vand.u32 %v94, 4294901760
    %1573 = vmatpush2.msra.mxu0 %v1572
    %1574 = vmatprep.subr.mxu0 0.0
    %v1575 = vand.u32 %v93, 4294901760
    %1576 = vmatpush2.msra.mxu0 %v1575
    %1577 = vmatprep.subr.mxu0 0.0
    %v1578 = vand.u32 %v92, 4294901760
    %1579 = vmatpush2.msra.mxu0 %v1578
    %v1580 = vand.u32 %v41, 4294901760
    %v1581 = vsub.f32 %v41, %v1580
    %v1582 = vand.u32 %v1581, 4294901760
    %1583 = vmatprep.mubr.f32.mxu0 %v1582
    %v1584 = vand.u32 %v40, 4294901760
    %v1585 = vsub.f32 %v40, %v1584
    %v1586 = vand.u32 %v1585, 4294901760
    %1587 = vmatmul.mubr.f32.gmra.mxu0 %v1586
    %v1588 = vpop.f32.mrf.mxu0
    %v1589 = vadd.f32 %v1481, %v1588
    %v1590 = vpop.f32.mrf.mxu0
    %1591 = vdwg.mxu0
    %1592 = vmatprep.subr.mxu0 0.0
    %v1593 = vand.u32 %v91, 4294901760
    %v1594 = vsub.f32 %v91, %v1593
    %v1595 = vand.u32 %v1594, 4294901760
    %1596 = vmatpush1.msra.mxu0 %v1595
    %1597 = vmatprep.subr.mxu0 0.0
    %v1598 = vand.u32 %v90, 4294901760
    %v1599 = vsub.f32 %v90, %v1598
    %v1600 = vand.u32 %v1599, 4294901760
    %1601 = vmatpush1.msra.mxu0 %v1600
    %1602 = vmatprep.subr.mxu0 0.0
    %v1603 = vand.u32 %v89, 4294901760
    %v1604 = vsub.f32 %v89, %v1603
    %v1605 = vand.u32 %v1604, 4294901760
    %1606 = vmatpush1.msra.mxu0 %v1605
    %1607 = vmatprep.subr.mxu0 0.0
    %v1608 = vand.u32 %v88, 4294901760
    %v1609 = vsub.f32 %v88, %v1608
    %v1610 = vand.u32 %v1609, 4294901760
    %1611 = vmatpush1.msra.mxu0 %v1610
    %1612 = vmatprep.subr.mxu0 0.0
    %v1613 = vand.u32 %v87, 4294901760
    %v1614 = vsub.f32 %v87, %v1613
    %v1615 = vand.u32 %v1614, 4294901760
    %1616 = vmatpush1.msra.mxu0 %v1615
    %1617 = vmatprep.subr.mxu0 0.0
    %v1618 = vand.u32 %v86, 4294901760
    %v1619 = vsub.f32 %v86, %v1618
    %v1620 = vand.u32 %v1619, 4294901760
    %1621 = vmatpush1.msra.mxu0 %v1620
    %1622 = vmatprep.subr.mxu0 0.0
    %v1623 = vand.u32 %v85, 4294901760
    %v1624 = vsub.f32 %v85, %v1623
    %v1625 = vand.u32 %v1624, 4294901760
    %1626 = vmatpush1.msra.mxu0 %v1625
    %1627 = vmatprep.subr.mxu0 0.0
    %v1628 = vand.u32 %v84, 4294901760
    %v1629 = vsub.f32 %v84, %v1628
    %v1630 = vand.u32 %v1629, 4294901760
    %1631 = vmatpush1.msra.mxu0 %v1630
    %1632 = vmatprep.subr.mxu0 0.0
    %v1633 = vand.u32 %v83, 4294901760
    %v1634 = vsub.f32 %v83, %v1633
    %v1635 = vand.u32 %v1634, 4294901760
    %1636 = vmatpush1.msra.mxu0 %v1635
    %1637 = vmatprep.subr.mxu0 0.0
    %v1638 = vand.u32 %v82, 4294901760
    %v1639 = vsub.f32 %v82, %v1638
    %v1640 = vand.u32 %v1639, 4294901760
    %1641 = vmatpush1.msra.mxu0 %v1640
    %1642 = vmatprep.subr.mxu0 0.0
    %v1643 = vand.u32 %v81, 4294901760
    %v1644 = vsub.f32 %v81, %v1643
    %v1645 = vand.u32 %v1644, 4294901760
    %1646 = vmatpush1.msra.mxu0 %v1645
    %1647 = vmatprep.subr.mxu0 0.0
    %v1648 = vand.u32 %v80, 4294901760
    %v1649 = vsub.f32 %v80, %v1648
    %v1650 = vand.u32 %v1649, 4294901760
    %1651 = vmatpush1.msra.mxu0 %v1650
    %1652 = vmatprep.subr.mxu0 0.0
    %v1653 = vand.u32 %v79, 4294901760
    %v1654 = vsub.f32 %v79, %v1653
    %v1655 = vand.u32 %v1654, 4294901760
    %1656 = vmatpush1.msra.mxu0 %v1655
    %1657 = vmatprep.subr.mxu0 0.0
    %v1658 = vand.u32 %v78, 4294901760
    %v1659 = vsub.f32 %v78, %v1658
    %v1660 = vand.u32 %v1659, 4294901760
    %1661 = vmatpush1.msra.mxu0 %v1660
    %1662 = vmatprep.subr.mxu0 0.0
    %v1663 = vand.u32 %v77, 4294901760
    %v1664 = vsub.f32 %v77, %v1663
    %v1665 = vand.u32 %v1664, 4294901760
    %1666 = vmatpush1.msra.mxu0 %v1665
    %1667 = vmatprep.subr.mxu0 0.0
    %v1668 = vand.u32 %v76, 4294901760
    %v1669 = vsub.f32 %v76, %v1668
    %v1670 = vand.u32 %v1669, 4294901760
    %1671 = vmatpush1.msra.mxu0 %v1670
    %1672 = vmatprep.subr.mxu0 0.0
    %v1673 = vand.u32 %v107, 4294901760
    %v1674 = vsub.f32 %v107, %v1673
    %v1675 = vand.u32 %v1674, 4294901760
    %1676 = vmatpush2.msra.mxu0 %v1675
    %1677 = vmatprep.subr.mxu0 0.0
    %v1678 = vand.u32 %v106, 4294901760
    %v1679 = vsub.f32 %v106, %v1678
    %v1680 = vand.u32 %v1679, 4294901760
    %1681 = vmatpush2.msra.mxu0 %v1680
    %1682 = vmatprep.subr.mxu0 0.0
    %v1683 = vand.u32 %v105, 4294901760
    %v1684 = vsub.f32 %v105, %v1683
    %v1685 = vand.u32 %v1684, 4294901760
    %1686 = vmatpush2.msra.mxu0 %v1685
    %1687 = vmatprep.subr.mxu0 0.0
    %v1688 = vand.u32 %v104, 4294901760
    %v1689 = vsub.f32 %v104, %v1688
    %v1690 = vand.u32 %v1689, 4294901760
    %1691 = vmatpush2.msra.mxu0 %v1690
    %1692 = vmatprep.subr.mxu0 0.0
    %v1693 = vand.u32 %v103, 4294901760
    %v1694 = vsub.f32 %v103, %v1693
    %v1695 = vand.u32 %v1694, 4294901760
    %1696 = vmatpush2.msra.mxu0 %v1695
    %1697 = vmatprep.subr.mxu0 0.0
    %v1698 = vand.u32 %v102, 4294901760
    %v1699 = vsub.f32 %v102, %v1698
    %v1700 = vand.u32 %v1699, 4294901760
    %1701 = vmatpush2.msra.mxu0 %v1700
    %1702 = vmatprep.subr.mxu0 0.0
    %v1703 = vand.u32 %v101, 4294901760
    %v1704 = vsub.f32 %v101, %v1703
    %v1705 = vand.u32 %v1704, 4294901760
    %1706 = vmatpush2.msra.mxu0 %v1705
    %1707 = vmatprep.subr.mxu0 0.0
    %v1708 = vand.u32 %v100, 4294901760
    %v1709 = vsub.f32 %v100, %v1708
    %v1710 = vand.u32 %v1709, 4294901760
    %1711 = vmatpush2.msra.mxu0 %v1710
    %1712 = vmatprep.subr.mxu0 0.0
    %v1713 = vand.u32 %v99, 4294901760
    %v1714 = vsub.f32 %v99, %v1713
    %v1715 = vand.u32 %v1714, 4294901760
    %1716 = vmatpush2.msra.mxu0 %v1715
    %1717 = vmatprep.subr.mxu0 0.0
    %v1718 = vand.u32 %v98, 4294901760
    %v1719 = vsub.f32 %v98, %v1718
    %v1720 = vand.u32 %v1719, 4294901760
    %1721 = vmatpush2.msra.mxu0 %v1720
    %1722 = vmatprep.subr.mxu0 0.0
    %v1723 = vand.u32 %v97, 4294901760
    %v1724 = vsub.f32 %v97, %v1723
    %v1725 = vand.u32 %v1724, 4294901760
    %1726 = vmatpush2.msra.mxu0 %v1725
    %1727 = vmatprep.subr.mxu0 0.0
    %v1728 = vand.u32 %v96, 4294901760
    %v1729 = vsub.f32 %v96, %v1728
    %v1730 = vand.u32 %v1729, 4294901760
    %1731 = vmatpush2.msra.mxu0 %v1730
    %1732 = vmatprep.subr.mxu0 0.0
    %v1733 = vand.u32 %v95, 4294901760
    %v1734 = vsub.f32 %v95, %v1733
    %v1735 = vand.u32 %v1734, 4294901760
    %1736 = vmatpush2.msra.mxu0 %v1735
    %1737 = vmatprep.subr.mxu0 0.0
    %v1738 = vand.u32 %v94, 4294901760
    %v1739 = vsub.f32 %v94, %v1738
    %v1740 = vand.u32 %v1739, 4294901760
    %1741 = vmatpush2.msra.mxu0 %v1740
    %1742 = vmatprep.subr.mxu0 0.0
    %v1743 = vand.u32 %v93, 4294901760
    %v1744 = vsub.f32 %v93, %v1743
    %v1745 = vand.u32 %v1744, 4294901760
    %1746 = vmatpush2.msra.mxu0 %v1745
    %1747 = vmatprep.subr.mxu0 0.0
    %v1748 = vand.u32 %v92, 4294901760
    %v1749 = vsub.f32 %v92, %v1748
    %v1750 = vand.u32 %v1749, 4294901760
    %1751 = vmatpush2.msra.mxu0 %v1750
    %v1752 = vand.u32 %v41, 4294901760
    %1753 = vmatprep.mubr.f32.mxu0 %v1752
    %v1754 = vand.u32 %v40, 4294901760
    %1755 = vmatmul.mubr.f32.gmra.mxu0 %v1754
    %v1756 = vpop.f32.mrf.mxu0
    %v1757 = vadd.f32 %v1589, %v1756
    %v1758 = vpop.f32.mrf.mxu0
    %1759 = vdwg.mxu0
    %1760 = vmatprep.subr.mxu0 0.0
    %v1761 = vand.u32 %v91, 4294901760
    %1762 = vmatpush1.msra.mxu0 %v1761
    %1763 = vmatprep.subr.mxu0 0.0
    %v1764 = vand.u32 %v90, 4294901760
    %1765 = vmatpush1.msra.mxu0 %v1764
    %1766 = vmatprep.subr.mxu0 0.0
    %v1767 = vand.u32 %v89, 4294901760
    %1768 = vmatpush1.msra.mxu0 %v1767
    %1769 = vmatprep.subr.mxu0 0.0
    %v1770 = vand.u32 %v88, 4294901760
    %1771 = vmatpush1.msra.mxu0 %v1770
    %1772 = vmatprep.subr.mxu0 0.0
    %v1773 = vand.u32 %v87, 4294901760
    %1774 = vmatpush1.msra.mxu0 %v1773
    %1775 = vmatprep.subr.mxu0 0.0
    %v1776 = vand.u32 %v86, 4294901760
    %1777 = vmatpush1.msra.mxu0 %v1776
    %1778 = vmatprep.subr.mxu0 0.0
    %v1779 = vand.u32 %v85, 4294901760
    %1780 = vmatpush1.msra.mxu0 %v1779
    %1781 = vmatprep.subr.mxu0 0.0
    %v1782 = vand.u32 %v84, 4294901760
    %1783 = vmatpush1.msra.mxu0 %v1782
    %1784 = vmatprep.subr.mxu0 0.0
    %v1785 = vand.u32 %v83, 4294901760
    %1786 = vmatpush1.msra.mxu0 %v1785
    %1787 = vmatprep.subr.mxu0 0.0
    %v1788 = vand.u32 %v82, 4294901760
    %1789 = vmatpush1.msra.mxu0 %v1788
    %1790 = vmatprep.subr.mxu0 0.0
    %v1791 = vand.u32 %v81, 4294901760
    %1792 = vmatpush1.msra.mxu0 %v1791
    %1793 = vmatprep.subr.mxu0 0.0
    %v1794 = vand.u32 %v80, 4294901760
    %1795 = vmatpush1.msra.mxu0 %v1794
    %1796 = vmatprep.subr.mxu0 0.0
    %v1797 = vand.u32 %v79, 4294901760
    %1798 = vmatpush1.msra.mxu0 %v1797
    %1799 = vmatprep.subr.mxu0 0.0
    %v1800 = vand.u32 %v78, 4294901760
    %1801 = vmatpush1.msra.mxu0 %v1800
    %1802 = vmatprep.subr.mxu0 0.0
    %v1803 = vand.u32 %v77, 4294901760
    %1804 = vmatpush1.msra.mxu0 %v1803
    %1805 = vmatprep.subr.mxu0 0.0
    %v1806 = vand.u32 %v76, 4294901760
    %1807 = vmatpush1.msra.mxu0 %v1806
    %1808 = vmatprep.subr.mxu0 0.0
    %v1809 = vand.u32 %v107, 4294901760
    %1810 = vmatpush2.msra.mxu0 %v1809
    %1811 = vmatprep.subr.mxu0 0.0
    %v1812 = vand.u32 %v106, 4294901760
    %1813 = vmatpush2.msra.mxu0 %v1812
    %1814 = vmatprep.subr.mxu0 0.0
    %v1815 = vand.u32 %v105, 4294901760
    %1816 = vmatpush2.msra.mxu0 %v1815
    %1817 = vmatprep.subr.mxu0 0.0
    %v1818 = vand.u32 %v104, 4294901760
    %1819 = vmatpush2.msra.mxu0 %v1818
    %1820 = vmatprep.subr.mxu0 0.0
    %v1821 = vand.u32 %v103, 4294901760
    %1822 = vmatpush2.msra.mxu0 %v1821
    %1823 = vmatprep.subr.mxu0 0.0
    %v1824 = vand.u32 %v102, 4294901760
    %1825 = vmatpush2.msra.mxu0 %v1824
    %1826 = vmatprep.subr.mxu0 0.0
    %v1827 = vand.u32 %v101, 4294901760
    %1828 = vmatpush2.msra.mxu0 %v1827
    %1829 = vmatprep.subr.mxu0 0.0
    %v1830 = vand.u32 %v100, 4294901760
    %1831 = vmatpush2.msra.mxu0 %v1830
    %1832 = vmatprep.subr.mxu0 0.0
    %v1833 = vand.u32 %v99, 4294901760
    %1834 = vmatpush2.msra.mxu0 %v1833
    %1835 = vmatprep.subr.mxu0 0.0
    %v1836 = vand.u32 %v98, 4294901760
    %1837 = vmatpush2.msra.mxu0 %v1836
    %1838 = vmatprep.subr.mxu0 0.0
    %v1839 = vand.u32 %v97, 4294901760
    %1840 = vmatpush2.msra.mxu0 %v1839
    %1841 = vmatprep.subr.mxu0 0.0
    %v1842 = vand.u32 %v96, 4294901760
    %1843 = vmatpush2.msra.mxu0 %v1842
    %1844 = vmatprep.subr.mxu0 0.0
    %v1845 = vand.u32 %v95, 4294901760
    %1846 = vmatpush2.msra.mxu0 %v1845
    %1847 = vmatprep.subr.mxu0 0.0
    %v1848 = vand.u32 %v94, 4294901760
    %1849 = vmatpush2.msra.mxu0 %v1848
    %1850 = vmatprep.subr.mxu0 0.0
    %v1851 = vand.u32 %v93, 4294901760
    %1852 = vmatpush2.msra.mxu0 %v1851
    %1853 = vmatprep.subr.mxu0 0.0
    %v1854 = vand.u32 %v92, 4294901760
    %1855 = vmatpush2.msra.mxu0 %v1854
    %v1856 = vand.u32 %v41, 4294901760
    %1857 = vmatprep.mubr.f32.mxu0 %v1856
    %v1858 = vand.u32 %v40, 4294901760
    %1859 = vmatmul.mubr.f32.gmra.mxu0 %v1858
    %v1860 = vpop.f32.mrf.mxu0
    %v1861 = vadd.f32 %v1757, %v1860
    %v1862 = vpop.f32.mrf.mxu0
    %1863 = vdwg.mxu0
    %1864 = vmatprep.subr.mxu0 0.0
    %v1865 = vand.u32 %v123, 4294901760
    %1866 = vmatpush1.msra.mxu0 %v1865
    %1867 = vmatprep.subr.mxu0 0.0
    %v1868 = vand.u32 %v122, 4294901760
    %1869 = vmatpush1.msra.mxu0 %v1868
    %1870 = vmatprep.subr.mxu0 0.0
    %v1871 = vand.u32 %v121, 4294901760
    %1872 = vmatpush1.msra.mxu0 %v1871
    %1873 = vmatprep.subr.mxu0 0.0
    %v1874 = vand.u32 %v120, 4294901760
    %1875 = vmatpush1.msra.mxu0 %v1874
    %1876 = vmatprep.subr.mxu0 0.0
    %v1877 = vand.u32 %v119, 4294901760
    %1878 = vmatpush1.msra.mxu0 %v1877
    %1879 = vmatprep.subr.mxu0 0.0
    %v1880 = vand.u32 %v118, 4294901760
    %1881 = vmatpush1.msra.mxu0 %v1880
    %1882 = vmatprep.subr.mxu0 0.0
    %v1883 = vand.u32 %v117, 4294901760
    %1884 = vmatpush1.msra.mxu0 %v1883
    %1885 = vmatprep.subr.mxu0 0.0
    %v1886 = vand.u32 %v116, 4294901760
    %1887 = vmatpush1.msra.mxu0 %v1886
    %1888 = vmatprep.subr.mxu0 0.0
    %v1889 = vand.u32 %v115, 4294901760
    %1890 = vmatpush1.msra.mxu0 %v1889
    %1891 = vmatprep.subr.mxu0 0.0
    %v1892 = vand.u32 %v114, 4294901760
    %1893 = vmatpush1.msra.mxu0 %v1892
    %1894 = vmatprep.subr.mxu0 0.0
    %v1895 = vand.u32 %v113, 4294901760
    %1896 = vmatpush1.msra.mxu0 %v1895
    %1897 = vmatprep.subr.mxu0 0.0
    %v1898 = vand.u32 %v112, 4294901760
    %1899 = vmatpush1.msra.mxu0 %v1898
    %1900 = vmatprep.subr.mxu0 0.0
    %v1901 = vand.u32 %v111, 4294901760
    %1902 = vmatpush1.msra.mxu0 %v1901
    %1903 = vmatprep.subr.mxu0 0.0
    %v1904 = vand.u32 %v110, 4294901760
    %1905 = vmatpush1.msra.mxu0 %v1904
    %1906 = vmatprep.subr.mxu0 0.0
    %v1907 = vand.u32 %v109, 4294901760
    %1908 = vmatpush1.msra.mxu0 %v1907
    %1909 = vmatprep.subr.mxu0 0.0
    %v1910 = vand.u32 %v108, 4294901760
    %1911 = vmatpush1.msra.mxu0 %v1910
    %1912 = vmatprep.subr.mxu0 0.0
    %v1913 = vand.u32 %v139, 4294901760
    %1914 = vmatpush2.msra.mxu0 %v1913
    %1915 = vmatprep.subr.mxu0 0.0
    %v1916 = vand.u32 %v138, 4294901760
    %1917 = vmatpush2.msra.mxu0 %v1916
    %1918 = vmatprep.subr.mxu0 0.0
    %v1919 = vand.u32 %v137, 4294901760
    %1920 = vmatpush2.msra.mxu0 %v1919
    %1921 = vmatprep.subr.mxu0 0.0
    %v1922 = vand.u32 %v136, 4294901760
    %1923 = vmatpush2.msra.mxu0 %v1922
    %1924 = vmatprep.subr.mxu0 0.0
    %v1925 = vand.u32 %v135, 4294901760
    %1926 = vmatpush2.msra.mxu0 %v1925
    %1927 = vmatprep.subr.mxu0 0.0
    %v1928 = vand.u32 %v134, 4294901760
    %1929 = vmatpush2.msra.mxu0 %v1928
    %1930 = vmatprep.subr.mxu0 0.0
    %v1931 = vand.u32 %v133, 4294901760
    %1932 = vmatpush2.msra.mxu0 %v1931
    %1933 = vmatprep.subr.mxu0 0.0
    %v1934 = vand.u32 %v132, 4294901760
    %1935 = vmatpush2.msra.mxu0 %v1934
    %1936 = vmatprep.subr.mxu0 0.0
    %v1937 = vand.u32 %v131, 4294901760
    %1938 = vmatpush2.msra.mxu0 %v1937
    %1939 = vmatprep.subr.mxu0 0.0
    %v1940 = vand.u32 %v130, 4294901760
    %1941 = vmatpush2.msra.mxu0 %v1940
    %1942 = vmatprep.subr.mxu0 0.0
    %v1943 = vand.u32 %v129, 4294901760
    %1944 = vmatpush2.msra.mxu0 %v1943
    %1945 = vmatprep.subr.mxu0 0.0
    %v1946 = vand.u32 %v128, 4294901760
    %1947 = vmatpush2.msra.mxu0 %v1946
    %1948 = vmatprep.subr.mxu0 0.0
    %v1949 = vand.u32 %v127, 4294901760
    %1950 = vmatpush2.msra.mxu0 %v1949
    %1951 = vmatprep.subr.mxu0 0.0
    %v1952 = vand.u32 %v126, 4294901760
    %1953 = vmatpush2.msra.mxu0 %v1952
    %1954 = vmatprep.subr.mxu0 0.0
    %v1955 = vand.u32 %v125, 4294901760
    %1956 = vmatpush2.msra.mxu0 %v1955
    %1957 = vmatprep.subr.mxu0 0.0
    %v1958 = vand.u32 %v124, 4294901760
    %1959 = vmatpush2.msra.mxu0 %v1958
    %v1960 = vand.u32 %v43, 4294901760
    %v1961 = vsub.f32 %v43, %v1960
    %v1962 = vand.u32 %v1961, 4294901760
    %v1963 = vsub.f32 %v1961, %v1962
    %v1964 = vand.u32 %v1963, 4294901760
    %1965 = vmatprep.mubr.f32.mxu0 %v1964
    %v1966 = vand.u32 %v42, 4294901760
    %v1967 = vsub.f32 %v42, %v1966
    %v1968 = vand.u32 %v1967, 4294901760
    %v1969 = vsub.f32 %v1967, %v1968
    %v1970 = vand.u32 %v1969, 4294901760
    %1971 = vmatmul.mubr.f32.gmra.mxu0 %v1970
    %v1972 = vpop.f32.mrf.mxu0
    %v1973 = vadd.f32 %v1861, %v1972
    %v1974 = vpop.f32.mrf.mxu0
    %1975 = vdwg.mxu0
    %1976 = vmatprep.subr.mxu0 0.0
    %v1977 = vand.u32 %v123, 4294901760
    %v1978 = vsub.f32 %v123, %v1977
    %v1979 = vand.u32 %v1978, 4294901760
    %v1980 = vsub.f32 %v1978, %v1979
    %v1981 = vand.u32 %v1980, 4294901760
    %1982 = vmatpush1.msra.mxu0 %v1981
    %1983 = vmatprep.subr.mxu0 0.0
    %v1984 = vand.u32 %v122, 4294901760
    %v1985 = vsub.f32 %v122, %v1984
    %v1986 = vand.u32 %v1985, 4294901760
    %v1987 = vsub.f32 %v1985, %v1986
    %v1988 = vand.u32 %v1987, 4294901760
    %1989 = vmatpush1.msra.mxu0 %v1988
    %1990 = vmatprep.subr.mxu0 0.0
    %v1991 = vand.u32 %v121, 4294901760
    %v1992 = vsub.f32 %v121, %v1991
    %v1993 = vand.u32 %v1992, 4294901760
    %v1994 = vsub.f32 %v1992, %v1993
    %v1995 = vand.u32 %v1994, 4294901760
    %1996 = vmatpush1.msra.mxu0 %v1995
    %1997 = vmatprep.subr.mxu0 0.0
    %v1998 = vand.u32 %v120, 4294901760
    %v1999 = vsub.f32 %v120, %v1998
    %v2000 = vand.u32 %v1999, 4294901760
    %v2001 = vsub.f32 %v1999, %v2000
    %v2002 = vand.u32 %v2001, 4294901760
    %2003 = vmatpush1.msra.mxu0 %v2002
    %2004 = vmatprep.subr.mxu0 0.0
    %v2005 = vand.u32 %v119, 4294901760
    %v2006 = vsub.f32 %v119, %v2005
    %v2007 = vand.u32 %v2006, 4294901760
    %v2008 = vsub.f32 %v2006, %v2007
    %v2009 = vand.u32 %v2008, 4294901760
    %2010 = vmatpush1.msra.mxu0 %v2009
    %2011 = vmatprep.subr.mxu0 0.0
    %v2012 = vand.u32 %v118, 4294901760
    %v2013 = vsub.f32 %v118, %v2012
    %v2014 = vand.u32 %v2013, 4294901760
    %v2015 = vsub.f32 %v2013, %v2014
    %v2016 = vand.u32 %v2015, 4294901760
    %2017 = vmatpush1.msra.mxu0 %v2016
    %2018 = vmatprep.subr.mxu0 0.0
    %v2019 = vand.u32 %v117, 4294901760
    %v2020 = vsub.f32 %v117, %v2019
    %v2021 = vand.u32 %v2020, 4294901760
    %v2022 = vsub.f32 %v2020, %v2021
    %v2023 = vand.u32 %v2022, 4294901760
    %2024 = vmatpush1.msra.mxu0 %v2023
    %2025 = vmatprep.subr.mxu0 0.0
    %v2026 = vand.u32 %v116, 4294901760
    %v2027 = vsub.f32 %v116, %v2026
    %v2028 = vand.u32 %v2027, 4294901760
    %v2029 = vsub.f32 %v2027, %v2028
    %v2030 = vand.u32 %v2029, 4294901760
    %2031 = vmatpush1.msra.mxu0 %v2030
    %2032 = vmatprep.subr.mxu0 0.0
    %v2033 = vand.u32 %v115, 4294901760
    %v2034 = vsub.f32 %v115, %v2033
    %v2035 = vand.u32 %v2034, 4294901760
    %v2036 = vsub.f32 %v2034, %v2035
    %v2037 = vand.u32 %v2036, 4294901760
    %2038 = vmatpush1.msra.mxu0 %v2037
    %2039 = vmatprep.subr.mxu0 0.0
    %v2040 = vand.u32 %v114, 4294901760
    %v2041 = vsub.f32 %v114, %v2040
    %v2042 = vand.u32 %v2041, 4294901760
    %v2043 = vsub.f32 %v2041, %v2042
    %v2044 = vand.u32 %v2043, 4294901760
    %2045 = vmatpush1.msra.mxu0 %v2044
    %2046 = vmatprep.subr.mxu0 0.0
    %v2047 = vand.u32 %v113, 4294901760
    %v2048 = vsub.f32 %v113, %v2047
    %v2049 = vand.u32 %v2048, 4294901760
    %v2050 = vsub.f32 %v2048, %v2049
    %v2051 = vand.u32 %v2050, 4294901760
    %2052 = vmatpush1.msra.mxu0 %v2051
    %2053 = vmatprep.subr.mxu0 0.0
    %v2054 = vand.u32 %v112, 4294901760
    %v2055 = vsub.f32 %v112, %v2054
    %v2056 = vand.u32 %v2055, 4294901760
    %v2057 = vsub.f32 %v2055, %v2056
    %v2058 = vand.u32 %v2057, 4294901760
    %2059 = vmatpush1.msra.mxu0 %v2058
    %2060 = vmatprep.subr.mxu0 0.0
    %v2061 = vand.u32 %v111, 4294901760
    %v2062 = vsub.f32 %v111, %v2061
    %v2063 = vand.u32 %v2062, 4294901760
    %v2064 = vsub.f32 %v2062, %v2063
    %v2065 = vand.u32 %v2064, 4294901760
    %2066 = vmatpush1.msra.mxu0 %v2065
    %2067 = vmatprep.subr.mxu0 0.0
    %v2068 = vand.u32 %v110, 4294901760
    %v2069 = vsub.f32 %v110, %v2068
    %v2070 = vand.u32 %v2069, 4294901760
    %v2071 = vsub.f32 %v2069, %v2070
    %v2072 = vand.u32 %v2071, 4294901760
    %2073 = vmatpush1.msra.mxu0 %v2072
    %2074 = vmatprep.subr.mxu0 0.0
    %v2075 = vand.u32 %v109, 4294901760
    %v2076 = vsub.f32 %v109, %v2075
    %v2077 = vand.u32 %v2076, 4294901760
    %v2078 = vsub.f32 %v2076, %v2077
    %v2079 = vand.u32 %v2078, 4294901760
    %2080 = vmatpush1.msra.mxu0 %v2079
    %2081 = vmatprep.subr.mxu0 0.0
    %v2082 = vand.u32 %v108, 4294901760
    %v2083 = vsub.f32 %v108, %v2082
    %v2084 = vand.u32 %v2083, 4294901760
    %v2085 = vsub.f32 %v2083, %v2084
    %v2086 = vand.u32 %v2085, 4294901760
    %2087 = vmatpush1.msra.mxu0 %v2086
    %2088 = vmatprep.subr.mxu0 0.0
    %v2089 = vand.u32 %v139, 4294901760
    %v2090 = vsub.f32 %v139, %v2089
    %v2091 = vand.u32 %v2090, 4294901760
    %v2092 = vsub.f32 %v2090, %v2091
    %v2093 = vand.u32 %v2092, 4294901760
    %2094 = vmatpush2.msra.mxu0 %v2093
    %2095 = vmatprep.subr.mxu0 0.0
    %v2096 = vand.u32 %v138, 4294901760
    %v2097 = vsub.f32 %v138, %v2096
    %v2098 = vand.u32 %v2097, 4294901760
    %v2099 = vsub.f32 %v2097, %v2098
    %v2100 = vand.u32 %v2099, 4294901760
    %2101 = vmatpush2.msra.mxu0 %v2100
    %2102 = vmatprep.subr.mxu0 0.0
    %v2103 = vand.u32 %v137, 4294901760
    %v2104 = vsub.f32 %v137, %v2103
    %v2105 = vand.u32 %v2104, 4294901760
    %v2106 = vsub.f32 %v2104, %v2105
    %v2107 = vand.u32 %v2106, 4294901760
    %2108 = vmatpush2.msra.mxu0 %v2107
    %2109 = vmatprep.subr.mxu0 0.0
    %v2110 = vand.u32 %v136, 4294901760
    %v2111 = vsub.f32 %v136, %v2110
    %v2112 = vand.u32 %v2111, 4294901760
    %v2113 = vsub.f32 %v2111, %v2112
    %v2114 = vand.u32 %v2113, 4294901760
    %2115 = vmatpush2.msra.mxu0 %v2114
    %2116 = vmatprep.subr.mxu0 0.0
    %v2117 = vand.u32 %v135, 4294901760
    %v2118 = vsub.f32 %v135, %v2117
    %v2119 = vand.u32 %v2118, 4294901760
    %v2120 = vsub.f32 %v2118, %v2119
    %v2121 = vand.u32 %v2120, 4294901760
    %2122 = vmatpush2.msra.mxu0 %v2121
    %2123 = vmatprep.subr.mxu0 0.0
    %v2124 = vand.u32 %v134, 4294901760
    %v2125 = vsub.f32 %v134, %v2124
    %v2126 = vand.u32 %v2125, 4294901760
    %v2127 = vsub.f32 %v2125, %v2126
    %v2128 = vand.u32 %v2127, 4294901760
    %2129 = vmatpush2.msra.mxu0 %v2128
    %2130 = vmatprep.subr.mxu0 0.0
    %v2131 = vand.u32 %v133, 4294901760
    %v2132 = vsub.f32 %v133, %v2131
    %v2133 = vand.u32 %v2132, 4294901760
    %v2134 = vsub.f32 %v2132, %v2133
    %v2135 = vand.u32 %v2134, 4294901760
    %2136 = vmatpush2.msra.mxu0 %v2135
    %2137 = vmatprep.subr.mxu0 0.0
    %v2138 = vand.u32 %v132, 4294901760
    %v2139 = vsub.f32 %v132, %v2138
    %v2140 = vand.u32 %v2139, 4294901760
    %v2141 = vsub.f32 %v2139, %v2140
    %v2142 = vand.u32 %v2141, 4294901760
    %2143 = vmatpush2.msra.mxu0 %v2142
    %2144 = vmatprep.subr.mxu0 0.0
    %v2145 = vand.u32 %v131, 4294901760
    %v2146 = vsub.f32 %v131, %v2145
    %v2147 = vand.u32 %v2146, 4294901760
    %v2148 = vsub.f32 %v2146, %v2147
    %v2149 = vand.u32 %v2148, 4294901760
    %2150 = vmatpush2.msra.mxu0 %v2149
    %2151 = vmatprep.subr.mxu0 0.0
    %v2152 = vand.u32 %v130, 4294901760
    %v2153 = vsub.f32 %v130, %v2152
    %v2154 = vand.u32 %v2153, 4294901760
    %v2155 = vsub.f32 %v2153, %v2154
    %v2156 = vand.u32 %v2155, 4294901760
    %2157 = vmatpush2.msra.mxu0 %v2156
    %2158 = vmatprep.subr.mxu0 0.0
    %v2159 = vand.u32 %v129, 4294901760
    %v2160 = vsub.f32 %v129, %v2159
    %v2161 = vand.u32 %v2160, 4294901760
    %v2162 = vsub.f32 %v2160, %v2161
    %v2163 = vand.u32 %v2162, 4294901760
    %2164 = vmatpush2.msra.mxu0 %v2163
    %2165 = vmatprep.subr.mxu0 0.0
    %v2166 = vand.u32 %v128, 4294901760
    %v2167 = vsub.f32 %v128, %v2166
    %v2168 = vand.u32 %v2167, 4294901760
    %v2169 = vsub.f32 %v2167, %v2168
    %v2170 = vand.u32 %v2169, 4294901760
    %2171 = vmatpush2.msra.mxu0 %v2170
    %2172 = vmatprep.subr.mxu0 0.0
    %v2173 = vand.u32 %v127, 4294901760
    %v2174 = vsub.f32 %v127, %v2173
    %v2175 = vand.u32 %v2174, 4294901760
    %v2176 = vsub.f32 %v2174, %v2175
    %v2177 = vand.u32 %v2176, 4294901760
    %2178 = vmatpush2.msra.mxu0 %v2177
    %2179 = vmatprep.subr.mxu0 0.0
    %v2180 = vand.u32 %v126, 4294901760
    %v2181 = vsub.f32 %v126, %v2180
    %v2182 = vand.u32 %v2181, 4294901760
    %v2183 = vsub.f32 %v2181, %v2182
    %v2184 = vand.u32 %v2183, 4294901760
    %2185 = vmatpush2.msra.mxu0 %v2184
    %2186 = vmatprep.subr.mxu0 0.0
    %v2187 = vand.u32 %v125, 4294901760
    %v2188 = vsub.f32 %v125, %v2187
    %v2189 = vand.u32 %v2188, 4294901760
    %v2190 = vsub.f32 %v2188, %v2189
    %v2191 = vand.u32 %v2190, 4294901760
    %2192 = vmatpush2.msra.mxu0 %v2191
    %2193 = vmatprep.subr.mxu0 0.0
    %v2194 = vand.u32 %v124, 4294901760
    %v2195 = vsub.f32 %v124, %v2194
    %v2196 = vand.u32 %v2195, 4294901760
    %v2197 = vsub.f32 %v2195, %v2196
    %v2198 = vand.u32 %v2197, 4294901760
    %2199 = vmatpush2.msra.mxu0 %v2198
    %v2200 = vand.u32 %v43, 4294901760
    %2201 = vmatprep.mubr.f32.mxu0 %v2200
    %v2202 = vand.u32 %v42, 4294901760
    %2203 = vmatmul.mubr.f32.gmra.mxu0 %v2202
    %v2204 = vpop.f32.mrf.mxu0
    %v2205 = vadd.f32 %v1973, %v2204
    %v2206 = vpop.f32.mrf.mxu0
    %2207 = vdwg.mxu0
    %2208 = vmatprep.subr.mxu0 0.0
    %v2209 = vand.u32 %v123, 4294901760
    %v2210 = vsub.f32 %v123, %v2209
    %2211 = vmatpush1.msra.mxu0 %v2210
    %2212 = vmatprep.subr.mxu0 0.0
    %v2213 = vand.u32 %v122, 4294901760
    %v2214 = vsub.f32 %v122, %v2213
    %2215 = vmatpush1.msra.mxu0 %v2214
    %2216 = vmatprep.subr.mxu0 0.0
    %v2217 = vand.u32 %v121, 4294901760
    %v2218 = vsub.f32 %v121, %v2217
    %2219 = vmatpush1.msra.mxu0 %v2218
    %2220 = vmatprep.subr.mxu0 0.0
    %v2221 = vand.u32 %v120, 4294901760
    %v2222 = vsub.f32 %v120, %v2221
    %2223 = vmatpush1.msra.mxu0 %v2222
    %2224 = vmatprep.subr.mxu0 0.0
    %v2225 = vand.u32 %v119, 4294901760
    %v2226 = vsub.f32 %v119, %v2225
    %2227 = vmatpush1.msra.mxu0 %v2226
    %2228 = vmatprep.subr.mxu0 0.0
    %v2229 = vand.u32 %v118, 4294901760
    %v2230 = vsub.f32 %v118, %v2229
    %2231 = vmatpush1.msra.mxu0 %v2230
    %2232 = vmatprep.subr.mxu0 0.0
    %v2233 = vand.u32 %v117, 4294901760
    %v2234 = vsub.f32 %v117, %v2233
    %2235 = vmatpush1.msra.mxu0 %v2234
    %2236 = vmatprep.subr.mxu0 0.0
    %v2237 = vand.u32 %v116, 4294901760
    %v2238 = vsub.f32 %v116, %v2237
    %2239 = vmatpush1.msra.mxu0 %v2238
    %2240 = vmatprep.subr.mxu0 0.0
    %v2241 = vand.u32 %v115, 4294901760
    %v2242 = vsub.f32 %v115, %v2241
    %2243 = vmatpush1.msra.mxu0 %v2242
    %2244 = vmatprep.subr.mxu0 0.0
    %v2245 = vand.u32 %v114, 4294901760
    %v2246 = vsub.f32 %v114, %v2245
    %2247 = vmatpush1.msra.mxu0 %v2246
    %2248 = vmatprep.subr.mxu0 0.0
    %v2249 = vand.u32 %v113, 4294901760
    %v2250 = vsub.f32 %v113, %v2249
    %2251 = vmatpush1.msra.mxu0 %v2250
    %2252 = vmatprep.subr.mxu0 0.0
    %v2253 = vand.u32 %v112, 4294901760
    %v2254 = vsub.f32 %v112, %v2253
    %2255 = vmatpush1.msra.mxu0 %v2254
    %2256 = vmatprep.subr.mxu0 0.0
    %v2257 = vand.u32 %v111, 4294901760
    %v2258 = vsub.f32 %v111, %v2257
    %2259 = vmatpush1.msra.mxu0 %v2258
    %2260 = vmatprep.subr.mxu0 0.0
    %v2261 = vand.u32 %v110, 4294901760
    %v2262 = vsub.f32 %v110, %v2261
    %2263 = vmatpush1.msra.mxu0 %v2262
    %2264 = vmatprep.subr.mxu0 0.0
    %v2265 = vand.u32 %v109, 4294901760
    %v2266 = vsub.f32 %v109, %v2265
    %2267 = vmatpush1.msra.mxu0 %v2266
    %2268 = vmatprep.subr.mxu0 0.0
    %v2269 = vand.u32 %v108, 4294901760
    %v2270 = vsub.f32 %v108, %v2269
    %2271 = vmatpush1.msra.mxu0 %v2270
    %2272 = vmatprep.subr.mxu0 0.0
    %v2273 = vand.u32 %v139, 4294901760
    %v2274 = vsub.f32 %v139, %v2273
    %2275 = vmatpush2.msra.mxu0 %v2274
    %2276 = vmatprep.subr.mxu0 0.0
    %v2277 = vand.u32 %v138, 4294901760
    %v2278 = vsub.f32 %v138, %v2277
    %2279 = vmatpush2.msra.mxu0 %v2278
    %2280 = vmatprep.subr.mxu0 0.0
    %v2281 = vand.u32 %v137, 4294901760
    %v2282 = vsub.f32 %v137, %v2281
    %2283 = vmatpush2.msra.mxu0 %v2282
    %2284 = vmatprep.subr.mxu0 0.0
    %v2285 = vand.u32 %v136, 4294901760
    %v2286 = vsub.f32 %v136, %v2285
    %2287 = vmatpush2.msra.mxu0 %v2286
    %2288 = vmatprep.subr.mxu0 0.0
    %v2289 = vand.u32 %v135, 4294901760
    %v2290 = vsub.f32 %v135, %v2289
    %2291 = vmatpush2.msra.mxu0 %v2290
    %2292 = vmatprep.subr.mxu0 0.0
    %v2293 = vand.u32 %v134, 4294901760
    %v2294 = vsub.f32 %v134, %v2293
    %2295 = vmatpush2.msra.mxu0 %v2294
    %2296 = vmatprep.subr.mxu0 0.0
    %v2297 = vand.u32 %v133, 4294901760
    %v2298 = vsub.f32 %v133, %v2297
    %2299 = vmatpush2.msra.mxu0 %v2298
    %2300 = vmatprep.subr.mxu0 0.0
    %v2301 = vand.u32 %v132, 4294901760
    %v2302 = vsub.f32 %v132, %v2301
    %2303 = vmatpush2.msra.mxu0 %v2302
    %2304 = vmatprep.subr.mxu0 0.0
    %v2305 = vand.u32 %v131, 4294901760
    %v2306 = vsub.f32 %v131, %v2305
    %2307 = vmatpush2.msra.mxu0 %v2306
    %2308 = vmatprep.subr.mxu0 0.0
    %v2309 = vand.u32 %v130, 4294901760
    %v2310 = vsub.f32 %v130, %v2309
    %2311 = vmatpush2.msra.mxu0 %v2310
    %2312 = vmatprep.subr.mxu0 0.0
    %v2313 = vand.u32 %v129, 4294901760
    %v2314 = vsub.f32 %v129, %v2313
    %2315 = vmatpush2.msra.mxu0 %v2314
    %2316 = vmatprep.subr.mxu0 0.0
    %v2317 = vand.u32 %v128, 4294901760
    %v2318 = vsub.f32 %v128, %v2317
    %2319 = vmatpush2.msra.mxu0 %v2318
    %2320 = vmatprep.subr.mxu0 0.0
    %v2321 = vand.u32 %v127, 4294901760
    %v2322 = vsub.f32 %v127, %v2321
    %2323 = vmatpush2.msra.mxu0 %v2322
    %2324 = vmatprep.subr.mxu0 0.0
    %v2325 = vand.u32 %v126, 4294901760
    %v2326 = vsub.f32 %v126, %v2325
    %2327 = vmatpush2.msra.mxu0 %v2326
    %2328 = vmatprep.subr.mxu0 0.0
    %v2329 = vand.u32 %v125, 4294901760
    %v2330 = vsub.f32 %v125, %v2329
    %2331 = vmatpush2.msra.mxu0 %v2330
    %2332 = vmatprep.subr.mxu0 0.0
    %v2333 = vand.u32 %v124, 4294901760
    %v2334 = vsub.f32 %v124, %v2333
    %2335 = vmatpush2.msra.mxu0 %v2334
    %v2336 = vand.u32 %v43, 4294901760
    %v2337 = vsub.f32 %v43, %v2336
    %2338 = vmatprep.mubr.f32.mxu0 %v2337
    %v2339 = vand.u32 %v42, 4294901760
    %v2340 = vsub.f32 %v42, %v2339
    %2341 = vmatmul.mubr.f32.gmra.mxu0 %v2340
    %v2342 = vpop.f32.mrf.mxu0
    %v2343 = vadd.f32 %v2205, %v2342
    %v2344 = vpop.f32.mrf.mxu0
    %2345 = vdwg.mxu0
    %2346 = vmatprep.subr.mxu0 0.0
    %v2347 = vand.u32 %v123, 4294901760
    %2348 = vmatpush1.msra.mxu0 %v2347
    %2349 = vmatprep.subr.mxu0 0.0
    %v2350 = vand.u32 %v122, 4294901760
    %2351 = vmatpush1.msra.mxu0 %v2350
    %2352 = vmatprep.subr.mxu0 0.0
    %v2353 = vand.u32 %v121, 4294901760
    %2354 = vmatpush1.msra.mxu0 %v2353
    %2355 = vmatprep.subr.mxu0 0.0
    %v2356 = vand.u32 %v120, 4294901760
    %2357 = vmatpush1.msra.mxu0 %v2356
    %2358 = vmatprep.subr.mxu0 0.0
    %v2359 = vand.u32 %v119, 4294901760
    %2360 = vmatpush1.msra.mxu0 %v2359
    %2361 = vmatprep.subr.mxu0 0.0
    %v2362 = vand.u32 %v118, 4294901760
    %2363 = vmatpush1.msra.mxu0 %v2362
    %2364 = vmatprep.subr.mxu0 0.0
    %v2365 = vand.u32 %v117, 4294901760
    %2366 = vmatpush1.msra.mxu0 %v2365
    %2367 = vmatprep.subr.mxu0 0.0
    %v2368 = vand.u32 %v116, 4294901760
    %2369 = vmatpush1.msra.mxu0 %v2368
    %2370 = vmatprep.subr.mxu0 0.0
    %v2371 = vand.u32 %v115, 4294901760
    %2372 = vmatpush1.msra.mxu0 %v2371
    %2373 = vmatprep.subr.mxu0 0.0
    %v2374 = vand.u32 %v114, 4294901760
    %2375 = vmatpush1.msra.mxu0 %v2374
    %2376 = vmatprep.subr.mxu0 0.0
    %v2377 = vand.u32 %v113, 4294901760
    %2378 = vmatpush1.msra.mxu0 %v2377
    %2379 = vmatprep.subr.mxu0 0.0
    %v2380 = vand.u32 %v112, 4294901760
    %2381 = vmatpush1.msra.mxu0 %v2380
    %2382 = vmatprep.subr.mxu0 0.0
    %v2383 = vand.u32 %v111, 4294901760
    %2384 = vmatpush1.msra.mxu0 %v2383
    %2385 = vmatprep.subr.mxu0 0.0
    %v2386 = vand.u32 %v110, 4294901760
    %2387 = vmatpush1.msra.mxu0 %v2386
    %2388 = vmatprep.subr.mxu0 0.0
    %v2389 = vand.u32 %v109, 4294901760
    %2390 = vmatpush1.msra.mxu0 %v2389
    %2391 = vmatprep.subr.mxu0 0.0
    %v2392 = vand.u32 %v108, 4294901760
    %2393 = vmatpush1.msra.mxu0 %v2392
    %2394 = vmatprep.subr.mxu0 0.0
    %v2395 = vand.u32 %v139, 4294901760
    %2396 = vmatpush2.msra.mxu0 %v2395
    %2397 = vmatprep.subr.mxu0 0.0
    %v2398 = vand.u32 %v138, 4294901760
    %2399 = vmatpush2.msra.mxu0 %v2398
    %2400 = vmatprep.subr.mxu0 0.0
    %v2401 = vand.u32 %v137, 4294901760
    %2402 = vmatpush2.msra.mxu0 %v2401
    %2403 = vmatprep.subr.mxu0 0.0
    %v2404 = vand.u32 %v136, 4294901760
    %2405 = vmatpush2.msra.mxu0 %v2404
    %2406 = vmatprep.subr.mxu0 0.0
    %v2407 = vand.u32 %v135, 4294901760
    %2408 = vmatpush2.msra.mxu0 %v2407
    %2409 = vmatprep.subr.mxu0 0.0
    %v2410 = vand.u32 %v134, 4294901760
    %2411 = vmatpush2.msra.mxu0 %v2410
    %2412 = vmatprep.subr.mxu0 0.0
    %v2413 = vand.u32 %v133, 4294901760
    %2414 = vmatpush2.msra.mxu0 %v2413
    %2415 = vmatprep.subr.mxu0 0.0
    %v2416 = vand.u32 %v132, 4294901760
    %2417 = vmatpush2.msra.mxu0 %v2416
    %2418 = vmatprep.subr.mxu0 0.0
    %v2419 = vand.u32 %v131, 4294901760
    %2420 = vmatpush2.msra.mxu0 %v2419
    %2421 = vmatprep.subr.mxu0 0.0
    %v2422 = vand.u32 %v130, 4294901760
    %2423 = vmatpush2.msra.mxu0 %v2422
    %2424 = vmatprep.subr.mxu0 0.0
    %v2425 = vand.u32 %v129, 4294901760
    %2426 = vmatpush2.msra.mxu0 %v2425
    %2427 = vmatprep.subr.mxu0 0.0
    %v2428 = vand.u32 %v128, 4294901760
    %2429 = vmatpush2.msra.mxu0 %v2428
    %2430 = vmatprep.subr.mxu0 0.0
    %v2431 = vand.u32 %v127, 4294901760
    %2432 = vmatpush2.msra.mxu0 %v2431
    %2433 = vmatprep.subr.mxu0 0.0
    %v2434 = vand.u32 %v126, 4294901760
    %2435 = vmatpush2.msra.mxu0 %v2434
    %2436 = vmatprep.subr.mxu0 0.0
    %v2437 = vand.u32 %v125, 4294901760
    %2438 = vmatpush2.msra.mxu0 %v2437
    %2439 = vmatprep.subr.mxu0 0.0
    %v2440 = vand.u32 %v124, 4294901760
    %2441 = vmatpush2.msra.mxu0 %v2440
    %v2442 = vand.u32 %v43, 4294901760
    %v2443 = vsub.f32 %v43, %v2442
    %v2444 = vand.u32 %v2443, 4294901760
    %2445 = vmatprep.mubr.f32.mxu0 %v2444
    %v2446 = vand.u32 %v42, 4294901760
    %v2447 = vsub.f32 %v42, %v2446
    %v2448 = vand.u32 %v2447, 4294901760
    %2449 = vmatmul.mubr.f32.gmra.mxu0 %v2448
    %v2450 = vpop.f32.mrf.mxu0
    %v2451 = vadd.f32 %v2343, %v2450
    %v2452 = vpop.f32.mrf.mxu0
    %2453 = vdwg.mxu0
    %2454 = vmatprep.subr.mxu0 0.0
    %v2455 = vand.u32 %v123, 4294901760
    %v2456 = vsub.f32 %v123, %v2455
    %v2457 = vand.u32 %v2456, 4294901760
    %2458 = vmatpush1.msra.mxu0 %v2457
    %2459 = vmatprep.subr.mxu0 0.0
    %v2460 = vand.u32 %v122, 4294901760
    %v2461 = vsub.f32 %v122, %v2460
    %v2462 = vand.u32 %v2461, 4294901760
    %2463 = vmatpush1.msra.mxu0 %v2462
    %2464 = vmatprep.subr.mxu0 0.0
    %v2465 = vand.u32 %v121, 4294901760
    %v2466 = vsub.f32 %v121, %v2465
    %v2467 = vand.u32 %v2466, 4294901760
    %2468 = vmatpush1.msra.mxu0 %v2467
    %2469 = vmatprep.subr.mxu0 0.0
    %v2470 = vand.u32 %v120, 4294901760
    %v2471 = vsub.f32 %v120, %v2470
    %v2472 = vand.u32 %v2471, 4294901760
    %2473 = vmatpush1.msra.mxu0 %v2472
    %2474 = vmatprep.subr.mxu0 0.0
    %v2475 = vand.u32 %v119, 4294901760
    %v2476 = vsub.f32 %v119, %v2475
    %v2477 = vand.u32 %v2476, 4294901760
    %2478 = vmatpush1.msra.mxu0 %v2477
    %2479 = vmatprep.subr.mxu0 0.0
    %v2480 = vand.u32 %v118, 4294901760
    %v2481 = vsub.f32 %v118, %v2480
    %v2482 = vand.u32 %v2481, 4294901760
    %2483 = vmatpush1.msra.mxu0 %v2482
    %2484 = vmatprep.subr.mxu0 0.0
    %v2485 = vand.u32 %v117, 4294901760
    %v2486 = vsub.f32 %v117, %v2485
    %v2487 = vand.u32 %v2486, 4294901760
    %2488 = vmatpush1.msra.mxu0 %v2487
    %2489 = vmatprep.subr.mxu0 0.0
    %v2490 = vand.u32 %v116, 4294901760
    %v2491 = vsub.f32 %v116, %v2490
    %v2492 = vand.u32 %v2491, 4294901760
    %2493 = vmatpush1.msra.mxu0 %v2492
    %2494 = vmatprep.subr.mxu0 0.0
    %v2495 = vand.u32 %v115, 4294901760
    %v2496 = vsub.f32 %v115, %v2495
    %v2497 = vand.u32 %v2496, 4294901760
    %2498 = vmatpush1.msra.mxu0 %v2497
    %2499 = vmatprep.subr.mxu0 0.0
    %v2500 = vand.u32 %v114, 4294901760
    %v2501 = vsub.f32 %v114, %v2500
    %v2502 = vand.u32 %v2501, 4294901760
    %2503 = vmatpush1.msra.mxu0 %v2502
    %2504 = vmatprep.subr.mxu0 0.0
    %v2505 = vand.u32 %v113, 4294901760
    %v2506 = vsub.f32 %v113, %v2505
    %v2507 = vand.u32 %v2506, 4294901760
    %2508 = vmatpush1.msra.mxu0 %v2507
    %2509 = vmatprep.subr.mxu0 0.0
    %v2510 = vand.u32 %v112, 4294901760
    %v2511 = vsub.f32 %v112, %v2510
    %v2512 = vand.u32 %v2511, 4294901760
    %2513 = vmatpush1.msra.mxu0 %v2512
    %2514 = vmatprep.subr.mxu0 0.0
    %v2515 = vand.u32 %v111, 4294901760
    %v2516 = vsub.f32 %v111, %v2515
    %v2517 = vand.u32 %v2516, 4294901760
    %2518 = vmatpush1.msra.mxu0 %v2517
    %2519 = vmatprep.subr.mxu0 0.0
    %v2520 = vand.u32 %v110, 4294901760
    %v2521 = vsub.f32 %v110, %v2520
    %v2522 = vand.u32 %v2521, 4294901760
    %2523 = vmatpush1.msra.mxu0 %v2522
    %2524 = vmatprep.subr.mxu0 0.0
    %v2525 = vand.u32 %v109, 4294901760
    %v2526 = vsub.f32 %v109, %v2525
    %v2527 = vand.u32 %v2526, 4294901760
    %2528 = vmatpush1.msra.mxu0 %v2527
    %2529 = vmatprep.subr.mxu0 0.0
    %v2530 = vand.u32 %v108, 4294901760
    %v2531 = vsub.f32 %v108, %v2530
    %v2532 = vand.u32 %v2531, 4294901760
    %2533 = vmatpush1.msra.mxu0 %v2532
    %2534 = vmatprep.subr.mxu0 0.0
    %v2535 = vand.u32 %v139, 4294901760
    %v2536 = vsub.f32 %v139, %v2535
    %v2537 = vand.u32 %v2536, 4294901760
    %2538 = vmatpush2.msra.mxu0 %v2537
    %2539 = vmatprep.subr.mxu0 0.0
    %v2540 = vand.u32 %v138, 4294901760
    %v2541 = vsub.f32 %v138, %v2540
    %v2542 = vand.u32 %v2541, 4294901760
    %2543 = vmatpush2.msra.mxu0 %v2542
    %2544 = vmatprep.subr.mxu0 0.0
    %v2545 = vand.u32 %v137, 4294901760
    %v2546 = vsub.f32 %v137, %v2545
    %v2547 = vand.u32 %v2546, 4294901760
    %2548 = vmatpush2.msra.mxu0 %v2547
    %2549 = vmatprep.subr.mxu0 0.0
    %v2550 = vand.u32 %v136, 4294901760
    %v2551 = vsub.f32 %v136, %v2550
    %v2552 = vand.u32 %v2551, 4294901760
    %2553 = vmatpush2.msra.mxu0 %v2552
    %2554 = vmatprep.subr.mxu0 0.0
    %v2555 = vand.u32 %v135, 4294901760
    %v2556 = vsub.f32 %v135, %v2555
    %v2557 = vand.u32 %v2556, 4294901760
    %2558 = vmatpush2.msra.mxu0 %v2557
    %2559 = vmatprep.subr.mxu0 0.0
    %v2560 = vand.u32 %v134, 4294901760
    %v2561 = vsub.f32 %v134, %v2560
    %v2562 = vand.u32 %v2561, 4294901760
    %2563 = vmatpush2.msra.mxu0 %v2562
    %2564 = vmatprep.subr.mxu0 0.0
    %v2565 = vand.u32 %v133, 4294901760
    %v2566 = vsub.f32 %v133, %v2565
    %v2567 = vand.u32 %v2566, 4294901760
    %2568 = vmatpush2.msra.mxu0 %v2567
    %2569 = vmatprep.subr.mxu0 0.0
    %v2570 = vand.u32 %v132, 4294901760
    %v2571 = vsub.f32 %v132, %v2570
    %v2572 = vand.u32 %v2571, 4294901760
    %2573 = vmatpush2.msra.mxu0 %v2572
    %2574 = vmatprep.subr.mxu0 0.0
    %v2575 = vand.u32 %v131, 4294901760
    %v2576 = vsub.f32 %v131, %v2575
    %v2577 = vand.u32 %v2576, 4294901760
    %2578 = vmatpush2.msra.mxu0 %v2577
    %2579 = vmatprep.subr.mxu0 0.0
    %v2580 = vand.u32 %v130, 4294901760
    %v2581 = vsub.f32 %v130, %v2580
    %v2582 = vand.u32 %v2581, 4294901760
    %2583 = vmatpush2.msra.mxu0 %v2582
    %2584 = vmatprep.subr.mxu0 0.0
    %v2585 = vand.u32 %v129, 4294901760
    %v2586 = vsub.f32 %v129, %v2585
    %v2587 = vand.u32 %v2586, 4294901760
    %2588 = vmatpush2.msra.mxu0 %v2587
    %2589 = vmatprep.subr.mxu0 0.0
    %v2590 = vand.u32 %v128, 4294901760
    %v2591 = vsub.f32 %v128, %v2590
    %v2592 = vand.u32 %v2591, 4294901760
    %2593 = vmatpush2.msra.mxu0 %v2592
    %2594 = vmatprep.subr.mxu0 0.0
    %v2595 = vand.u32 %v127, 4294901760
    %v2596 = vsub.f32 %v127, %v2595
    %v2597 = vand.u32 %v2596, 4294901760
    %2598 = vmatpush2.msra.mxu0 %v2597
    %2599 = vmatprep.subr.mxu0 0.0
    %v2600 = vand.u32 %v126, 4294901760
    %v2601 = vsub.f32 %v126, %v2600
    %v2602 = vand.u32 %v2601, 4294901760
    %2603 = vmatpush2.msra.mxu0 %v2602
    %2604 = vmatprep.subr.mxu0 0.0
    %v2605 = vand.u32 %v125, 4294901760
    %v2606 = vsub.f32 %v125, %v2605
    %v2607 = vand.u32 %v2606, 4294901760
    %2608 = vmatpush2.msra.mxu0 %v2607
    %2609 = vmatprep.subr.mxu0 0.0
    %v2610 = vand.u32 %v124, 4294901760
    %v2611 = vsub.f32 %v124, %v2610
    %v2612 = vand.u32 %v2611, 4294901760
    %2613 = vmatpush2.msra.mxu0 %v2612
    %v2614 = vand.u32 %v43, 4294901760
    %2615 = vmatprep.mubr.f32.mxu0 %v2614
    %v2616 = vand.u32 %v42, 4294901760
    %2617 = vmatmul.mubr.f32.gmra.mxu0 %v2616
    %v2618 = vpop.f32.mrf.mxu0
    %v2619 = vadd.f32 %v2451, %v2618
    %v2620 = vpop.f32.mrf.mxu0
    %2621 = vdwg.mxu0
    %2622 = vmatprep.subr.mxu0 0.0
    %v2623 = vand.u32 %v123, 4294901760
    %2624 = vmatpush1.msra.mxu0 %v2623
    %2625 = vmatprep.subr.mxu0 0.0
    %v2626 = vand.u32 %v122, 4294901760
    %2627 = vmatpush1.msra.mxu0 %v2626
    %2628 = vmatprep.subr.mxu0 0.0
    %v2629 = vand.u32 %v121, 4294901760
    %2630 = vmatpush1.msra.mxu0 %v2629
    %2631 = vmatprep.subr.mxu0 0.0
    %v2632 = vand.u32 %v120, 4294901760
    %2633 = vmatpush1.msra.mxu0 %v2632
    %2634 = vmatprep.subr.mxu0 0.0
    %v2635 = vand.u32 %v119, 4294901760
    %2636 = vmatpush1.msra.mxu0 %v2635
    %2637 = vmatprep.subr.mxu0 0.0
    %v2638 = vand.u32 %v118, 4294901760
    %2639 = vmatpush1.msra.mxu0 %v2638
    %2640 = vmatprep.subr.mxu0 0.0
    %v2641 = vand.u32 %v117, 4294901760
    %2642 = vmatpush1.msra.mxu0 %v2641
    %2643 = vmatprep.subr.mxu0 0.0
    %v2644 = vand.u32 %v116, 4294901760
    %2645 = vmatpush1.msra.mxu0 %v2644
    %2646 = vmatprep.subr.mxu0 0.0
    %v2647 = vand.u32 %v115, 4294901760
    %2648 = vmatpush1.msra.mxu0 %v2647
    %2649 = vmatprep.subr.mxu0 0.0
    %v2650 = vand.u32 %v114, 4294901760
    %2651 = vmatpush1.msra.mxu0 %v2650
    %2652 = vmatprep.subr.mxu0 0.0
    %v2653 = vand.u32 %v113, 4294901760
    %2654 = vmatpush1.msra.mxu0 %v2653
    %2655 = vmatprep.subr.mxu0 0.0
    %v2656 = vand.u32 %v112, 4294901760
    %2657 = vmatpush1.msra.mxu0 %v2656
    %2658 = vmatprep.subr.mxu0 0.0
    %v2659 = vand.u32 %v111, 4294901760
    %2660 = vmatpush1.msra.mxu0 %v2659
    %2661 = vmatprep.subr.mxu0 0.0
    %v2662 = vand.u32 %v110, 4294901760
    %2663 = vmatpush1.msra.mxu0 %v2662
    %2664 = vmatprep.subr.mxu0 0.0
    %v2665 = vand.u32 %v109, 4294901760
    %2666 = vmatpush1.msra.mxu0 %v2665
    %2667 = vmatprep.subr.mxu0 0.0
    %v2668 = vand.u32 %v108, 4294901760
    %2669 = vmatpush1.msra.mxu0 %v2668
    %2670 = vmatprep.subr.mxu0 0.0
    %v2671 = vand.u32 %v139, 4294901760
    %2672 = vmatpush2.msra.mxu0 %v2671
    %2673 = vmatprep.subr.mxu0 0.0
    %v2674 = vand.u32 %v138, 4294901760
    %2675 = vmatpush2.msra.mxu0 %v2674
    %2676 = vmatprep.subr.mxu0 0.0
    %v2677 = vand.u32 %v137, 4294901760
    %2678 = vmatpush2.msra.mxu0 %v2677
    %2679 = vmatprep.subr.mxu0 0.0
    %v2680 = vand.u32 %v136, 4294901760
    %2681 = vmatpush2.msra.mxu0 %v2680
    %2682 = vmatprep.subr.mxu0 0.0
    %v2683 = vand.u32 %v135, 4294901760
    %2684 = vmatpush2.msra.mxu0 %v2683
    %2685 = vmatprep.subr.mxu0 0.0
    %v2686 = vand.u32 %v134, 4294901760
    %2687 = vmatpush2.msra.mxu0 %v2686
    %2688 = vmatprep.subr.mxu0 0.0
    %v2689 = vand.u32 %v133, 4294901760
    %2690 = vmatpush2.msra.mxu0 %v2689
    %2691 = vmatprep.subr.mxu0 0.0
    %v2692 = vand.u32 %v132, 4294901760
    %2693 = vmatpush2.msra.mxu0 %v2692
    %2694 = vmatprep.subr.mxu0 0.0
    %v2695 = vand.u32 %v131, 4294901760
    %2696 = vmatpush2.msra.mxu0 %v2695
    %2697 = vmatprep.subr.mxu0 0.0
    %v2698 = vand.u32 %v130, 4294901760
    %2699 = vmatpush2.msra.mxu0 %v2698
    %2700 = vmatprep.subr.mxu0 0.0
    %v2701 = vand.u32 %v129, 4294901760
    %2702 = vmatpush2.msra.mxu0 %v2701
    %2703 = vmatprep.subr.mxu0 0.0
    %v2704 = vand.u32 %v128, 4294901760
    %2705 = vmatpush2.msra.mxu0 %v2704
    %2706 = vmatprep.subr.mxu0 0.0
    %v2707 = vand.u32 %v127, 4294901760
    %2708 = vmatpush2.msra.mxu0 %v2707
    %2709 = vmatprep.subr.mxu0 0.0
    %v2710 = vand.u32 %v126, 4294901760
    %2711 = vmatpush2.msra.mxu0 %v2710
    %2712 = vmatprep.subr.mxu0 0.0
    %v2713 = vand.u32 %v125, 4294901760
    %2714 = vmatpush2.msra.mxu0 %v2713
    %2715 = vmatprep.subr.mxu0 0.0
    %v2716 = vand.u32 %v124, 4294901760
    %2717 = vmatpush2.msra.mxu0 %v2716
    %v2718 = vand.u32 %v43, 4294901760
    %2719 = vmatprep.mubr.f32.mxu0 %v2718
    %v2720 = vand.u32 %v42, 4294901760
    %2721 = vmatmul.mubr.f32.gmra.mxu0 %v2720
    %v2722 = vpop.f32.mrf.mxu0
    %v2723 = vadd.f32 %v2619, %v2722
    %v2724 = vpop.f32.mrf.mxu0
    %2725 = vdwg.mxu0
    %2726 = vst [vmem:[#allocation7] sm:$0xff] %v2723
    // Predicated region
    $region18: #{tpu_custom_call.1} parent=1 // pred_check
      _
    $region19: #{tpu_custom_call.1} parent=1 // pred_check_branch
      %2728 = sbr.rel (0) target = $region21
    $region20: #{tpu_custom_call.1} parent=1 // pred_region
      %s2730 = ssub.s32 128, 128
      %2731 = vsyncadd [#allocation4], %s2730
      %s2733 = sshll.u32 [#allocation7], 4
      %s2734 = int_to_ptr.vmem [resolvable:$true] %s2733
      %2736 = dma.vmem_to_hbm [thread:$0]  %s2734, 128, %s2, [#allocation4]
    $region21: #{tpu_custom_call.1} parent=1 // pred_fallthru
      _
    // Predicated region
    $region22: #{tpu_custom_call.1} parent=1 // pred_check
      _
    $region23: #{tpu_custom_call.1} parent=1 // pred_check_branch
      %2738 = sbr.rel (0) target = $region25
    $region24: #{tpu_custom_call.1} parent=1 // pred_region
      %2739 = dma.done [#allocation4], 128
    $region25: #{tpu_custom_call.1} parent=1 // pred_fallthru
      _
    %2740 = vsyncpa [#allocation3], 1
    %2741 = vsyncpa [#allocation6], 1
    %2742 = vsyncpa [#allocation4], 1

</llo_original>
